<compile_context>
chip_gen: v7x
topology: tpu7x:2x2x1
jax: 0.10.0
libtpu: 0.0.40
codegen_flags: <defaults>
</compile_context>

<pallas_src>
import jax
import jax.numpy as jnp
from jax.experimental import pallas as pl
from jax.experimental.pallas import tpu as pltpu

NEG_SLOPE = 0.2   # LeakyReLU(0.2) used throughout the reference stack
_LP = 8           # sublane-aligned data start row in pad_buf (zero pad at row 7)


def _leaky(x):
    return jnp.where(x >= 0, x, NEG_SLOPE * x)


def _shift_down(v):
    """out[t] = v[t-1], out[0] = 0  (zero-padded shift along time/sublanes)."""
    z = jnp.zeros((1, v.shape[1]), v.dtype)
    return jnp.concatenate([z, v[:-1]], axis=0)


def _shift_up(v):
    """out[t] = v[t+1], out[T-1] = 0."""
    z = jnp.zeros((1, v.shape[1]), v.dtype)
    return jnp.concatenate([v[1:], z], axis=0)


def _res_conv(x, w_ref, b_ref, c):
    """Conv1d(c, c, k=3, s=1, p=1) on a value x:(T, c).

    w_ref is the (3c, c) im2col weight (rows [k*c:(k+1)*c] = tap k = x[t+k-1]).
    Implemented as three K=c matmuls whose f32 results are shifted/accumulated,
    so no padded staging buffer and no bf16 slab are materialized.
    """
    xb = x.astype(jnp.bfloat16)
    y_l = jnp.dot(xb, w_ref[0:c, :], preferred_element_type=jnp.float32)
    y_c = jnp.dot(xb, w_ref[c:2 * c, :], preferred_element_type=jnp.float32)
    y_r = jnp.dot(xb, w_ref[2 * c:3 * c, :], preferred_element_type=jnp.float32)
    return _shift_down(y_l) + y_c + _shift_up(y_r) + b_ref[...]


# ------------------------------ fused kernel -------------------------------

def make_fused_kernel(layer_dims, b_tile):
    """Fused [Conv1d(4,2,1) -> LeakyReLU -> ResBlock] stack for B_TILE elements.

    layer_dims: tuple of (t_in, cin, cout) per layer (static Python ints).

    Ref layout:
      refs[0]            : x_ref   (B_TILE, T, Cin0)  f32
      refs[1 : 1+6L]     : per layer [conv_w (4*Cin,Cout) bf16, conv_b (1,Cout) f32,
                                       res_w1 (3*C,C) bf16,     res_b1 (1,C)  f32,
                                       res_w2 (3*C,C) bf16,     res_b2 (1,C)  f32]
      refs[1+6L]         : o_ref   (B_TILE, T_out, Cout) f32
      refs[2+6L]         : pad_buf (T + 2*_LP, Cmax)     f32  VMEM scratch
    """
    n_layers = len(layer_dims)

    def kernel(*refs):
        x_ref = refs[0]
        w_refs = refs[1:1 + 6 * n_layers]
        o_ref = refs[1 + 6 * n_layers]
        pad_ref = refs[2 + 6 * n_layers]

        for b in range(b_tile):                       # static unroll over batch tile
            a = x_ref[b]                              # (T, Cin0) f32 value
            for l, (tl, cin, cout) in enumerate(layer_dims):
                to = tl // 2
                cw, cb, rw1, rb1, rw2, rb2 = w_refs[6 * l:6 * l + 6]

                # ---- Conv1d(k=4, s=2, p=1) + LeakyReLU (single K=4*cin matmul).
                # Stage the layer input ONCE into pad_buf with a sublane-aligned
                # interior (rows [_LP, _LP+tl)), zero pad rows at _LP-1 and _LP+tl.
                zin = jnp.zeros((1, cin), jnp.float32)
                pad_ref[_LP - 1:_LP, 0:cin] = zin
                pad_ref[_LP + tl:_LP + tl + 1, 0:cin] = zin
                pad_ref[_LP:_LP + tl, 0:cin] = a

                # im2col slab row t = [xpad[2t], xpad[2t+1], xpad[2t+2], xpad[2t+3]]
                taps = [pad_ref[pl.ds(_LP - 1 + j, to, 2), 0:cin] for j in range(4)]
                slab = jnp.concatenate(taps, axis=-1).astype(jnp.bfloat16)
                h = jnp.dot(slab, cw[...], preferred_element_type=jnp.float32)
                h = _leaky(h + cb[...])               # (to, cout) f32 epilogue

                # ---- ResBlock: Conv3 -> LeakyReLU -> Conv3 + identity (value-based)
                h1 = _leaky(_res_conv(h, rw1, rb1, cout))
                a = _res_conv(h1, rw2, rb2, cout) + h  # residual add in f32

            o_ref[b] = a.astype(o_ref.dtype)

    return kernel


# ------------------------------- JAX wrapper --------------------------------

def vq_encoder_forward(params, inputs):
    """VQEncoderV3.forward.  inputs: (B, T, vae_test_dim) -> (B, T/2**L, vae_length)."""
    bsz, t, cin0 = inputs.shape
    n_layers = len(params["main"])
    assert t % (2 ** n_layers) == 0, "T must be divisible by 2**vae_layer"

    layer_dims = []
    flat_weights = []
    tl, cin = t, cin0
    for layer in params["main"]:
        cout = layer["conv_w"].shape[-1]
        layer_dims.append((tl, cin, cout))
        flat_weights += [
            layer["conv_w"].astype(jnp.bfloat16),   # (4*cin, cout) im2col layout
            layer["conv_b"].astype(jnp.float32),    # (1, cout)
            layer["res_w1"].astype(jnp.bfloat16),   # (3*cout, cout)
            layer["res_b1"].astype(jnp.float32),
            layer["res_w2"].astype(jnp.bfloat16),   # (3*cout, cout)
            layer["res_b2"].astype(jnp.float32),
        ]
        tl //= 2
        cin = cout
    t_out, c_out = tl, cin
    c_max = max(max(ci, co) for (_, ci, co) in layer_dims)

    # Batch tile per grid step (amortizes per-step overhead / weight revisits).
    b_tile = 1
    for cand in (8, 4, 2):
        if bsz % cand == 0:
            b_tile = cand
            break

    in_specs = [pl.BlockSpec((b_tile, t, cin0), lambda i: (i, 0, 0))]
    for (_, ci, co) in layer_dims:
        in_specs += [
            pl.BlockSpec((4 * ci, co), lambda i: (0, 0)),
            pl.BlockSpec((1, co), lambda i: (0, 0)),
            pl.BlockSpec((3 * co, co), lambda i: (0, 0)),
            pl.BlockSpec((1, co), lambda i: (0, 0)),
            pl.BlockSpec((3 * co, co), lambda i: (0, 0)),
            pl.BlockSpec((1, co), lambda i: (0, 0)),
        ]
    out_specs = pl.BlockSpec((b_tile, t_out, c_out), lambda i: (i, 0, 0))

    # Explicit scoped-VMEM budget: double-buffered I/O blocks + double-buffered
    # weights + pad_buf, with headroom; capped at v7x's 64 MiB physical per TC.
    w_bytes = sum((4 * ci * co + 6 * co * co) * 2 + 3 * co * 4
                  for (_, ci, co) in layer_dims)
    io_bytes = 2 * 4 * b_tile * (t * cin0 + t_out * c_out)
    pad_bytes = (t + 2 * _LP) * c_max * 4
    vmem_budget = int(1.5 * (2 * w_bytes + io_bytes + pad_bytes)) + (8 << 20)
    vmem_budget = max(16 << 20, min(vmem_budget, 64 << 20))

    kernel = make_fused_kernel(tuple(layer_dims), b_tile)
    return pl.pallas_call(
        kernel,
        out_shape=jax.ShapeDtypeStruct((bsz, t_out, c_out), inputs.dtype),
        grid=(bsz // b_tile,),
        in_specs=in_specs,
        out_specs=out_specs,
        scratch_shapes=[
            pltpu.VMEM((t + 2 * _LP, c_max), jnp.float32),   # padded-time staging
        ],
        compiler_params=pltpu.CompilerParams(
            dimension_semantics=("parallel",),               # megacore on v7x
            vmem_limit_bytes=vmem_budget),
    )(inputs, *flat_weights)


# --------------------------- pure-JAX reference ------------------------------

def _ref_conv_s2(x, w, b):    # Conv1d(k=4, s=2, p=1), x:(B,T,Cin), w:(4Cin,Cout)
    to = x.shape[1] // 2
    xp = jnp.pad(x, ((0, 0), (1, 1), (0, 0)))
    taps = [xp[:, j:j + 2 * to:2, :] for j in range(4)]
    return jnp.concatenate(taps, axis=-1) @ w + b


def _ref_conv_s1(x, w, b):    # Conv1d(k=3, s=1, p=1), w:(3C,C)
    T = x.shape[1]
    xp = jnp.pad(x, ((0, 0), (1, 1), (0, 0)))
    slab = jnp.concatenate([xp[:, k:k + T, :] for k in range(3)], axis=-1)
    return slab @ w + b


def vq_encoder_reference(params, x):
    for layer in params["main"]:
        h = _leaky(_ref_conv_s2(x, layer["conv_w"], layer["conv_b"]))
        h1 = _leaky(_ref_conv_s1(h, layer["res_w1"], layer["res_b1"]))
        x = _ref_conv_s1(h1, layer["res_w2"], layer["res_b2"]) + h
    return x


# --------------------------- synthetic parameters ---------------------------

def init_params(key, vae_test_dim, vae_length, vae_layer):
    # TODO(synk): init_weight from the reference repo is not defined in the
    # spec; a deterministic scaled-normal init is used for this synthetic test.
    # Weight layout: im2col (K*Cin, Cout). A real PyTorch Conv1d weight of
    # shape (Cout, Cin, K) maps via w.transpose(2, 1, 0).reshape(K*Cin, Cout).
    def normal(k, shape, scale=0.1):
        return scale * jax.random.normal(k, shape, dtype=jnp.float32)

    keys = iter(jax.random.split(key, 6 * vae_layer))
    main = []
    cin = vae_test_dim
    for _ in range(vae_layer):
        cout = vae_length
        main.append({
            "conv_w": normal(next(keys), (4 * cin, cout)),
            "conv_b": normal(next(keys), (1, cout), 0.01),
            "res_w1": normal(next(keys), (3 * cout, cout)),
            "res_b1": normal(next(keys), (1, cout), 0.01),
            "res_w2": normal(next(keys), (3 * cout, cout)),
            "res_b2": normal(next(keys), (1, cout), 0.01),
        })
        cin = cout
    return {"main": main}


if __name__ == "__main__":
    # args: vae_test_dim = vae_length = 32, vae_layer = 2 (small test shapes)
    vae_test_dim, vae_length, vae_layer = 32, 32, 2
    bs, t = 2, 16

    key = jax.random.PRNGKey(0)
    pkey, xkey = jax.random.split(key)
    params = init_params(pkey, vae_test_dim, vae_length, vae_layer)
    x = jax.random.normal(xkey, (bs, t, vae_test_dim), dtype=jnp.float32)

    out = jax.block_until_ready(vq_encoder_forward(params, x))
    assert out.shape == (bs, t // (2 ** vae_layer), vae_length), out.shape
    assert bool(jnp.all(jnp.isfinite(out)))

    # bf16-matmul kernel vs f32 reference: loose parity check.
    ref = vq_encoder_reference(params, x)
    max_err = float(jnp.max(jnp.abs(out - ref)))
    max_ref = float(jnp.max(jnp.abs(ref)))
    assert max_err <= 2e-2 * max_ref + 2e-2, (max_err, max_ref)

    print("KERNEL_OK")
</pallas_src>

<mosaic_0001>
module attributes {stable_mosaic.version = 11 : i64} {
  func.func @kernel(%arg0: i32, %arg1: memref<2x16x32xf32, #tpu.memory_space<vmem>>, %arg2: memref<128x32xbf16, #tpu.memory_space<vmem>>, %arg3: memref<1x32xf32, #tpu.memory_space<vmem>>, %arg4: memref<96x32xbf16, #tpu.memory_space<vmem>>, %arg5: memref<1x32xf32, #tpu.memory_space<vmem>>, %arg6: memref<96x32xbf16, #tpu.memory_space<vmem>>, %arg7: memref<1x32xf32, #tpu.memory_space<vmem>>, %arg8: memref<128x32xbf16, #tpu.memory_space<vmem>>, %arg9: memref<1x32xf32, #tpu.memory_space<vmem>>, %arg10: memref<96x32xbf16, #tpu.memory_space<vmem>>, %arg11: memref<1x32xf32, #tpu.memory_space<vmem>>, %arg12: memref<96x32xbf16, #tpu.memory_space<vmem>>, %arg13: memref<1x32xf32, #tpu.memory_space<vmem>>, %arg14: memref<2x4x32xf32, #tpu.memory_space<vmem>>, %arg15: memref<32x32xf32, #tpu.memory_space<vmem>>) attributes {dimension_semantics = [#tpu.dimension_semantics<parallel>], iteration_bounds = array<i64: 1>, scalar_prefetch = 0 : i64, scratch_operands = 1 : i64, tpu.core_type = #tpu.core_type<tc>, window_params = [{transform_indices = @transform_0, window_bounds = array<i64: 2, 16, 32>}, {pipeline_mode = #tpu.pipeline_mode<synchronous>, transform_indices = @transform_1, window_bounds = array<i64: 128, 32>}, {pipeline_mode = #tpu.pipeline_mode<synchronous>, transform_indices = @transform_2, window_bounds = array<i64: 1, 32>}, {pipeline_mode = #tpu.pipeline_mode<synchronous>, transform_indices = @transform_3, window_bounds = array<i64: 96, 32>}, {pipeline_mode = #tpu.pipeline_mode<synchronous>, transform_indices = @transform_4, window_bounds = array<i64: 1, 32>}, {pipeline_mode = #tpu.pipeline_mode<synchronous>, transform_indices = @transform_5, window_bounds = array<i64: 96, 32>}, {pipeline_mode = #tpu.pipeline_mode<synchronous>, transform_indices = @transform_6, window_bounds = array<i64: 1, 32>}, {pipeline_mode = #tpu.pipeline_mode<synchronous>, transform_indices = @transform_7, window_bounds = array<i64: 128, 32>}, {pipeline_mode = #tpu.pipeline_mode<synchronous>, transform_indices = @transform_8, window_bounds = array<i64: 1, 32>}, {pipeline_mode = #tpu.pipeline_mode<synchronous>, transform_indices = @transform_9, window_bounds = array<i64: 96, 32>}, {pipeline_mode = #tpu.pipeline_mode<synchronous>, transform_indices = @transform_10, window_bounds = array<i64: 1, 32>}, {pipeline_mode = #tpu.pipeline_mode<synchronous>, transform_indices = @transform_11, window_bounds = array<i64: 96, 32>}, {pipeline_mode = #tpu.pipeline_mode<synchronous>, transform_indices = @transform_12, window_bounds = array<i64: 1, 32>}, {transform_indices = @transform_13, window_bounds = array<i64: 2, 4, 32>}]} {
    %c0 = arith.constant 0 : index
    %c0_0 = arith.constant 0 : index
    %c0_1 = arith.constant 0 : index
    %0 = vector.load %arg1[%c0, %c0_0, %c0_1] : memref<2x16x32xf32, #tpu.memory_space<vmem>>, vector<1x16x32xf32>
    %1 = vector.shape_cast %0 : vector<1x16x32xf32> to vector<16x32xf32>
    %cst = arith.constant 0.000000e+00 : f32
    %2 = vector.broadcast %cst : f32 to vector<1x32xf32>
    %c7 = arith.constant 7 : index
    %c0_2 = arith.constant 0 : index
    %3 = vector.load %arg15[%c7, %c0_2] : memref<32x32xf32, #tpu.memory_space<vmem>>, vector<1x32xf32>
    tpu.vector_store %arg15[%c7, %c0_2], %2 {strides = array<i32>} : memref<32x32xf32, #tpu.memory_space<vmem>>, vector<1x32xf32>,
    %c24 = arith.constant 24 : index
    %c0_3 = arith.constant 0 : index
    %4 = vector.load %arg15[%c24, %c0_3] : memref<32x32xf32, #tpu.memory_space<vmem>>, vector<1x32xf32>
    tpu.vector_store %arg15[%c24, %c0_3], %2 {strides = array<i32>} : memref<32x32xf32, #tpu.memory_space<vmem>>, vector<1x32xf32>,
    %c8 = arith.constant 8 : index
    %c0_4 = arith.constant 0 : index
    %5 = vector.load %arg15[%c8, %c0_4] : memref<32x32xf32, #tpu.memory_space<vmem>>, vector<16x32xf32>
    tpu.vector_store %arg15[%c8, %c0_4], %1 {strides = array<i32>} : memref<32x32xf32, #tpu.memory_space<vmem>>, vector<16x32xf32>,
    %c7_5 = arith.constant 7 : index
    %c0_6 = arith.constant 0 : index
    %6 = tpu.strided_load %arg15[%c7_5, %c0_6] {strides = array<i32: 2, 1>} : memref<32x32xf32, #tpu.memory_space<vmem>>, vector<8x32xf32>
    %c8_7 = arith.constant 8 : index
    %c0_8 = arith.constant 0 : index
    %7 = tpu.strided_load %arg15[%c8_7, %c0_8] {strides = array<i32: 2, 1>} : memref<32x32xf32, #tpu.memory_space<vmem>>, vector<8x32xf32>
    %c9 = arith.constant 9 : index
    %c0_9 = arith.constant 0 : index
    %8 = tpu.strided_load %arg15[%c9, %c0_9] {strides = array<i32: 2, 1>} : memref<32x32xf32, #tpu.memory_space<vmem>>, vector<8x32xf32>
    %c10 = arith.constant 10 : index
    %c0_10 = arith.constant 0 : index
    %9 = tpu.strided_load %arg15[%c10, %c0_10] {strides = array<i32: 2, 1>} : memref<32x32xf32, #tpu.memory_space<vmem>>, vector<8x32xf32>
    %10 = tpu.concatenate %6, %7, %8, %9 in 1 : vector<8x32xf32>, vector<8x32xf32>, vector<8x32xf32>, vector<8x32xf32> -> vector<8x128xf32>
    %11 = arith.truncf %10 : vector<8x128xf32> to vector<8x128xbf16>
    %c0_11 = arith.constant 0 : index
    %c0_12 = arith.constant 0 : index
    %12 = vector.load %arg2[%c0_11, %c0_12] : memref<128x32xbf16, #tpu.memory_space<vmem>>, vector<128x32xbf16>
    %cst_13 = arith.constant dense<0.000000e+00> : vector<8x32xf32>
    %13 = tpu.matmul %11, %12, %cst_13 {dimension_numbers = #tpu.dot_dimension_numbers<[1], [0], [0], [1], [0, 0, 1, 1], [], []>} : vector<8x128xbf16>, vector<128x32xbf16>, vector<8x32xf32> -> vector<8x32xf32>
    %c0_14 = arith.constant 0 : index
    %c0_15 = arith.constant 0 : index
    %14 = vector.load %arg3[%c0_14, %c0_15] : memref<1x32xf32, #tpu.memory_space<vmem>>, vector<1x32xf32>
    %15 = vector.broadcast %14 : vector<1x32xf32> to vector<8x32xf32>
    %16 = arith.addf %13, %15 : vector<8x32xf32>
    %cst_16 = arith.constant 0.000000e+00 : f32
    %17 = vector.broadcast %cst_16 : f32 to vector<8x32xf32>
    %18 = arith.cmpf oge, %16, %17 : vector<8x32xf32>
    %cst_17 = arith.constant 2.000000e-01 : f32
    %19 = vector.broadcast %cst_17 : f32 to vector<8x32xf32>
    %20 = arith.mulf %19, %16 : vector<8x32xf32>
    %21 = arith.select %18, %16, %20 : vector<8x32xi1>, vector<8x32xf32>
    %22 = arith.truncf %21 : vector<8x32xf32> to vector<8x32xbf16>
    %c0_18 = arith.constant 0 : index
    %c0_19 = arith.constant 0 : index
    %23 = vector.load %arg4[%c0_18, %c0_19] : memref<96x32xbf16, #tpu.memory_space<vmem>>, vector<32x32xbf16>
    %cst_20 = arith.constant dense<0.000000e+00> : vector<8x32xf32>
    %24 = tpu.matmul %22, %23, %cst_20 {dimension_numbers = #tpu.dot_dimension_numbers<[1], [0], [0], [1], [0, 0, 1, 1], [], []>} : vector<8x32xbf16>, vector<32x32xbf16>, vector<8x32xf32> -> vector<8x32xf32>
    %c32 = arith.constant 32 : index
    %c0_21 = arith.constant 0 : index
    %25 = vector.load %arg4[%c32, %c0_21] : memref<96x32xbf16, #tpu.memory_space<vmem>>, vector<32x32xbf16>
    %cst_22 = arith.constant dense<0.000000e+00> : vector<8x32xf32>
    %26 = tpu.matmul %22, %25, %cst_22 {dimension_numbers = #tpu.dot_dimension_numbers<[1], [0], [0], [1], [0, 0, 1, 1], [], []>} : vector<8x32xbf16>, vector<32x32xbf16>, vector<8x32xf32> -> vector<8x32xf32>
    %c64 = arith.constant 64 : index
    %c0_23 = arith.constant 0 : index
    %27 = vector.load %arg4[%c64, %c0_23] : memref<96x32xbf16, #tpu.memory_space<vmem>>, vector<32x32xbf16>
    %cst_24 = arith.constant dense<0.000000e+00> : vector<8x32xf32>
    %28 = tpu.matmul %22, %27, %cst_24 {dimension_numbers = #tpu.dot_dimension_numbers<[1], [0], [0], [1], [0, 0, 1, 1], [], []>} : vector<8x32xbf16>, vector<32x32xbf16>, vector<8x32xf32> -> vector<8x32xf32>
    %cst_25 = arith.constant 0.000000e+00 : f32
    %29 = vector.broadcast %cst_25 : f32 to vector<1x32xf32>
    %30 = vector.extract_strided_slice %24 {offsets = [0, 0], sizes = [7, 32], strides = [1, 1]} : vector<8x32xf32> to vector<7x32xf32>
    %31 = tpu.concatenate %29, %30 in 0 : vector<1x32xf32>, vector<7x32xf32> -> vector<8x32xf32>
    %32 = arith.addf %31, %26 : vector<8x32xf32>
    %cst_26 = arith.constant 0.000000e+00 : f32
    %33 = vector.broadcast %cst_26 : f32 to vector<1x32xf32>
    %34 = vector.extract_strided_slice %28 {offsets = [1, 0], sizes = [7, 32], strides = [1, 1]} : vector<8x32xf32> to vector<7x32xf32>
    %35 = tpu.concatenate %34, %33 in 0 : vector<7x32xf32>, vector<1x32xf32> -> vector<8x32xf32>
    %36 = arith.addf %32, %35 : vector<8x32xf32>
    %c0_27 = arith.constant 0 : index
    %c0_28 = arith.constant 0 : index
    %37 = vector.load %arg5[%c0_27, %c0_28] : memref<1x32xf32, #tpu.memory_space<vmem>>, vector<1x32xf32>
    %38 = vector.broadcast %37 : vector<1x32xf32> to vector<8x32xf32>
    %39 = arith.addf %36, %38 : vector<8x32xf32>
    %cst_29 = arith.constant 0.000000e+00 : f32
    %40 = vector.broadcast %cst_29 : f32 to vector<8x32xf32>
    %41 = arith.cmpf oge, %39, %40 : vector<8x32xf32>
    %cst_30 = arith.constant 2.000000e-01 : f32
    %42 = vector.broadcast %cst_30 : f32 to vector<8x32xf32>
    %43 = arith.mulf %42, %39 : vector<8x32xf32>
    %44 = arith.select %41, %39, %43 : vector<8x32xi1>, vector<8x32xf32>
    %45 = arith.truncf %44 : vector<8x32xf32> to vector<8x32xbf16>
    %c0_31 = arith.constant 0 : index
    %c0_32 = arith.constant 0 : index
    %46 = vector.load %arg6[%c0_31, %c0_32] : memref<96x32xbf16, #tpu.memory_space<vmem>>, vector<32x32xbf16>
    %cst_33 = arith.constant dense<0.000000e+00> : vector<8x32xf32>
    %47 = tpu.matmul %45, %46, %cst_33 {dimension_numbers = #tpu.dot_dimension_numbers<[1], [0], [0], [1], [0, 0, 1, 1], [], []>} : vector<8x32xbf16>, vector<32x32xbf16>, vector<8x32xf32> -> vector<8x32xf32>
    %c32_34 = arith.constant 32 : index
    %c0_35 = arith.constant 0 : index
    %48 = vector.load %arg6[%c32_34, %c0_35] : memref<96x32xbf16, #tpu.memory_space<vmem>>, vector<32x32xbf16>
    %cst_36 = arith.constant dense<0.000000e+00> : vector<8x32xf32>
    %49 = tpu.matmul %45, %48, %cst_36 {dimension_numbers = #tpu.dot_dimension_numbers<[1], [0], [0], [1], [0, 0, 1, 1], [], []>} : vector<8x32xbf16>, vector<32x32xbf16>, vector<8x32xf32> -> vector<8x32xf32>
    %c64_37 = arith.constant 64 : index
    %c0_38 = arith.constant 0 : index
    %50 = vector.load %arg6[%c64_37, %c0_38] : memref<96x32xbf16, #tpu.memory_space<vmem>>, vector<32x32xbf16>
    %cst_39 = arith.constant dense<0.000000e+00> : vector<8x32xf32>
    %51 = tpu.matmul %45, %50, %cst_39 {dimension_numbers = #tpu.dot_dimension_numbers<[1], [0], [0], [1], [0, 0, 1, 1], [], []>} : vector<8x32xbf16>, vector<32x32xbf16>, vector<8x32xf32> -> vector<8x32xf32>
    %cst_40 = arith.constant 0.000000e+00 : f32
    %52 = vector.broadcast %cst_40 : f32 to vector<1x32xf32>
    %53 = vector.extract_strided_slice %47 {offsets = [0, 0], sizes = [7, 32], strides = [1, 1]} : vector<8x32xf32> to vector<7x32xf32>
    %54 = tpu.concatenate %52, %53 in 0 : vector<1x32xf32>, vector<7x32xf32> -> vector<8x32xf32>
    %55 = arith.addf %54, %49 : vector<8x32xf32>
    %cst_41 = arith.constant 0.000000e+00 : f32
    %56 = vector.broadcast %cst_41 : f32 to vector<1x32xf32>
    %57 = vector.extract_strided_slice %51 {offsets = [1, 0], sizes = [7, 32], strides = [1, 1]} : vector<8x32xf32> to vector<7x32xf32>
    %58 = tpu.concatenate %57, %56 in 0 : vector<7x32xf32>, vector<1x32xf32> -> vector<8x32xf32>
    %59 = arith.addf %55, %58 : vector<8x32xf32>
    %c0_42 = arith.constant 0 : index
    %c0_43 = arith.constant 0 : index
    %60 = vector.load %arg7[%c0_42, %c0_43] : memref<1x32xf32, #tpu.memory_space<vmem>>, vector<1x32xf32>
    %61 = vector.broadcast %60 : vector<1x32xf32> to vector<8x32xf32>
    %62 = arith.addf %59, %61 : vector<8x32xf32>
    %63 = arith.addf %62, %21 : vector<8x32xf32>
    %cst_44 = arith.constant 0.000000e+00 : f32
    %64 = vector.broadcast %cst_44 : f32 to vector<1x32xf32>
    %c7_45 = arith.constant 7 : index
    %c0_46 = arith.constant 0 : index
    %65 = vector.load %arg15[%c7_45, %c0_46] : memref<32x32xf32, #tpu.memory_space<vmem>>, vector<1x32xf32>
    tpu.vector_store %arg15[%c7_45, %c0_46], %64 {strides = array<i32>} : memref<32x32xf32, #tpu.memory_space<vmem>>, vector<1x32xf32>,
    %c16 = arith.constant 16 : index
    %c0_47 = arith.constant 0 : index
    %66 = vector.load %arg15[%c16, %c0_47] : memref<32x32xf32, #tpu.memory_space<vmem>>, vector<1x32xf32>
    tpu.vector_store %arg15[%c16, %c0_47], %64 {strides = array<i32>} : memref<32x32xf32, #tpu.memory_space<vmem>>, vector<1x32xf32>,
    %c8_48 = arith.constant 8 : index
    %c0_49 = arith.constant 0 : index
    %67 = vector.load %arg15[%c8_48, %c0_49] : memref<32x32xf32, #tpu.memory_space<vmem>>, vector<8x32xf32>
    tpu.vector_store %arg15[%c8_48, %c0_49], %63 {strides = array<i32>} : memref<32x32xf32, #tpu.memory_space<vmem>>, vector<8x32xf32>,
    %c7_50 = arith.constant 7 : index
    %c0_51 = arith.constant 0 : index
    %68 = tpu.strided_load %arg15[%c7_50, %c0_51] {strides = array<i32: 2, 1>} : memref<32x32xf32, #tpu.memory_space<vmem>>, vector<4x32xf32>
    %c8_52 = arith.constant 8 : index
    %c0_53 = arith.constant 0 : index
    %69 = tpu.strided_load %arg15[%c8_52, %c0_53] {strides = array<i32: 2, 1>} : memref<32x32xf32, #tpu.memory_space<vmem>>, vector<4x32xf32>
    %c9_54 = arith.constant 9 : index
    %c0_55 = arith.constant 0 : index
    %70 = tpu.strided_load %arg15[%c9_54, %c0_55] {strides = array<i32: 2, 1>} : memref<32x32xf32, #tpu.memory_space<vmem>>, vector<4x32xf32>
    %c10_56 = arith.constant 10 : index
    %c0_57 = arith.constant 0 : index
    %71 = tpu.strided_load %arg15[%c10_56, %c0_57] {strides = array<i32: 2, 1>} : memref<32x32xf32, #tpu.memory_space<vmem>>, vector<4x32xf32>
    %72 = tpu.concatenate %68, %69, %70, %71 in 1 : vector<4x32xf32>, vector<4x32xf32>, vector<4x32xf32>, vector<4x32xf32> -> vector<4x128xf32>
    %73 = arith.truncf %72 : vector<4x128xf32> to vector<4x128xbf16>
    %c0_58 = arith.constant 0 : index
    %c0_59 = arith.constant 0 : index
    %74 = vector.load %arg8[%c0_58, %c0_59] : memref<128x32xbf16, #tpu.memory_space<vmem>>, vector<128x32xbf16>
    %cst_60 = arith.constant dense<0.000000e+00> : vector<4x32xf32>
    %75 = tpu.matmul %73, %74, %cst_60 {dimension_numbers = #tpu.dot_dimension_numbers<[1], [0], [0], [1], [0, 0, 1, 1], [], []>} : vector<4x128xbf16>, vector<128x32xbf16>, vector<4x32xf32> -> vector<4x32xf32>
    %c0_61 = arith.constant 0 : index
    %c0_62 = arith.constant 0 : index
    %76 = vector.load %arg9[%c0_61, %c0_62] : memref<1x32xf32, #tpu.memory_space<vmem>>, vector<1x32xf32>
    %77 = vector.broadcast %76 : vector<1x32xf32> to vector<4x32xf32>
    %78 = arith.addf %75, %77 : vector<4x32xf32>
    %cst_63 = arith.constant 0.000000e+00 : f32
    %79 = vector.broadcast %cst_63 : f32 to vector<4x32xf32>
    %80 = arith.cmpf oge, %78, %79 : vector<4x32xf32>
    %cst_64 = arith.constant 2.000000e-01 : f32
    %81 = vector.broadcast %cst_64 : f32 to vector<4x32xf32>
    %82 = arith.mulf %81, %78 : vector<4x32xf32>
    %83 = arith.select %80, %78, %82 : vector<4x32xi1>, vector<4x32xf32>
    %84 = arith.truncf %83 : vector<4x32xf32> to vector<4x32xbf16>
    %c0_65 = arith.constant 0 : index
    %c0_66 = arith.constant 0 : index
    %85 = vector.load %arg10[%c0_65, %c0_66] : memref<96x32xbf16, #tpu.memory_space<vmem>>, vector<32x32xbf16>
    %cst_67 = arith.constant dense<0.000000e+00> : vector<4x32xf32>
    %86 = tpu.matmul %84, %85, %cst_67 {dimension_numbers = #tpu.dot_dimension_numbers<[1], [0], [0], [1], [0, 0, 1, 1], [], []>} : vector<4x32xbf16>, vector<32x32xbf16>, vector<4x32xf32> -> vector<4x32xf32>
    %c32_68 = arith.constant 32 : index
    %c0_69 = arith.constant 0 : index
    %87 = vector.load %arg10[%c32_68, %c0_69] : memref<96x32xbf16, #tpu.memory_space<vmem>>, vector<32x32xbf16>
    %cst_70 = arith.constant dense<0.000000e+00> : vector<4x32xf32>
    %88 = tpu.matmul %84, %87, %cst_70 {dimension_numbers = #tpu.dot_dimension_numbers<[1], [0], [0], [1], [0, 0, 1, 1], [], []>} : vector<4x32xbf16>, vector<32x32xbf16>, vector<4x32xf32> -> vector<4x32xf32>
    %c64_71 = arith.constant 64 : index
    %c0_72 = arith.constant 0 : index
    %89 = vector.load %arg10[%c64_71, %c0_72] : memref<96x32xbf16, #tpu.memory_space<vmem>>, vector<32x32xbf16>
    %cst_73 = arith.constant dense<0.000000e+00> : vector<4x32xf32>
    %90 = tpu.matmul %84, %89, %cst_73 {dimension_numbers = #tpu.dot_dimension_numbers<[1], [0], [0], [1], [0, 0, 1, 1], [], []>} : vector<4x32xbf16>, vector<32x32xbf16>, vector<4x32xf32> -> vector<4x32xf32>
    %cst_74 = arith.constant 0.000000e+00 : f32
    %91 = vector.broadcast %cst_74 : f32 to vector<1x32xf32>
    %92 = vector.extract_strided_slice %86 {offsets = [0, 0], sizes = [3, 32], strides = [1, 1]} : vector<4x32xf32> to vector<3x32xf32>
    %93 = tpu.concatenate %91, %92 in 0 : vector<1x32xf32>, vector<3x32xf32> -> vector<4x32xf32>
    %94 = arith.addf %93, %88 : vector<4x32xf32>
    %cst_75 = arith.constant 0.000000e+00 : f32
    %95 = vector.broadcast %cst_75 : f32 to vector<1x32xf32>
    %96 = vector.extract_strided_slice %90 {offsets = [1, 0], sizes = [3, 32], strides = [1, 1]} : vector<4x32xf32> to vector<3x32xf32>
    %97 = tpu.concatenate %96, %95 in 0 : vector<3x32xf32>, vector<1x32xf32> -> vector<4x32xf32>
    %98 = arith.addf %94, %97 : vector<4x32xf32>
    %c0_76 = arith.constant 0 : index
    %c0_77 = arith.constant 0 : index
    %99 = vector.load %arg11[%c0_76, %c0_77] : memref<1x32xf32, #tpu.memory_space<vmem>>, vector<1x32xf32>
    %100 = vector.broadcast %99 : vector<1x32xf32> to vector<4x32xf32>
    %101 = arith.addf %98, %100 : vector<4x32xf32>
    %cst_78 = arith.constant 0.000000e+00 : f32
    %102 = vector.broadcast %cst_78 : f32 to vector<4x32xf32>
    %103 = arith.cmpf oge, %101, %102 : vector<4x32xf32>
    %cst_79 = arith.constant 2.000000e-01 : f32
    %104 = vector.broadcast %cst_79 : f32 to vector<4x32xf32>
    %105 = arith.mulf %104, %101 : vector<4x32xf32>
    %106 = arith.select %103, %101, %105 : vector<4x32xi1>, vector<4x32xf32>
    %107 = arith.truncf %106 : vector<4x32xf32> to vector<4x32xbf16>
    %c0_80 = arith.constant 0 : index
    %c0_81 = arith.constant 0 : index
    %108 = vector.load %arg12[%c0_80, %c0_81] : memref<96x32xbf16, #tpu.memory_space<vmem>>, vector<32x32xbf16>
    %cst_82 = arith.constant dense<0.000000e+00> : vector<4x32xf32>
    %109 = tpu.matmul %107, %108, %cst_82 {dimension_numbers = #tpu.dot_dimension_numbers<[1], [0], [0], [1], [0, 0, 1, 1], [], []>} : vector<4x32xbf16>, vector<32x32xbf16>, vector<4x32xf32> -> vector<4x32xf32>
    %c32_83 = arith.constant 32 : index
    %c0_84 = arith.constant 0 : index
    %110 = vector.load %arg12[%c32_83, %c0_84] : memref<96x32xbf16, #tpu.memory_space<vmem>>, vector<32x32xbf16>
    %cst_85 = arith.constant dense<0.000000e+00> : vector<4x32xf32>
    %111 = tpu.matmul %107, %110, %cst_85 {dimension_numbers = #tpu.dot_dimension_numbers<[1], [0], [0], [1], [0, 0, 1, 1], [], []>} : vector<4x32xbf16>, vector<32x32xbf16>, vector<4x32xf32> -> vector<4x32xf32>
    %c64_86 = arith.constant 64 : index
    %c0_87 = arith.constant 0 : index
    %112 = vector.load %arg12[%c64_86, %c0_87] : memref<96x32xbf16, #tpu.memory_space<vmem>>, vector<32x32xbf16>
    %cst_88 = arith.constant dense<0.000000e+00> : vector<4x32xf32>
    %113 = tpu.matmul %107, %112, %cst_88 {dimension_numbers = #tpu.dot_dimension_numbers<[1], [0], [0], [1], [0, 0, 1, 1], [], []>} : vector<4x32xbf16>, vector<32x32xbf16>, vector<4x32xf32> -> vector<4x32xf32>
    %cst_89 = arith.constant 0.000000e+00 : f32
    %114 = vector.broadcast %cst_89 : f32 to vector<1x32xf32>
    %115 = vector.extract_strided_slice %109 {offsets = [0, 0], sizes = [3, 32], strides = [1, 1]} : vector<4x32xf32> to vector<3x32xf32>
    %116 = tpu.concatenate %114, %115 in 0 : vector<1x32xf32>, vector<3x32xf32> -> vector<4x32xf32>
    %117 = arith.addf %116, %111 : vector<4x32xf32>
    %cst_90 = arith.constant 0.000000e+00 : f32
    %118 = vector.broadcast %cst_90 : f32 to vector<1x32xf32>
    %119 = vector.extract_strided_slice %113 {offsets = [1, 0], sizes = [3, 32], strides = [1, 1]} : vector<4x32xf32> to vector<3x32xf32>
    %120 = tpu.concatenate %119, %118 in 0 : vector<3x32xf32>, vector<1x32xf32> -> vector<4x32xf32>
    %121 = arith.addf %117, %120 : vector<4x32xf32>
    %c0_91 = arith.constant 0 : index
    %c0_92 = arith.constant 0 : index
    %122 = vector.load %arg13[%c0_91, %c0_92] : memref<1x32xf32, #tpu.memory_space<vmem>>, vector<1x32xf32>
    %123 = vector.broadcast %122 : vector<1x32xf32> to vector<4x32xf32>
    %124 = arith.addf %121, %123 : vector<4x32xf32>
    %125 = arith.addf %124, %83 : vector<4x32xf32>
    %c0_93 = arith.constant 0 : index
    %c0_94 = arith.constant 0 : index
    %c0_95 = arith.constant 0 : index
    %126 = vector.load %arg14[%c0_93, %c0_94, %c0_95] : memref<2x4x32xf32, #tpu.memory_space<vmem>>, vector<1x4x32xf32>
    %127 = vector.shape_cast %126 : vector<1x4x32xf32> to vector<4x32xf32>
    %128 = vector.shape_cast %125 : vector<4x32xf32> to vector<1x4x32xf32>
    tpu.vector_store %arg14[%c0_93, %c0_94, %c0_95], %128 {strides = array<i32>} : memref<2x4x32xf32, #tpu.memory_space<vmem>>, vector<1x4x32xf32>,
    %c1 = arith.constant 1 : index
    %c0_96 = arith.constant 0 : index
    %c0_97 = arith.constant 0 : index
    %129 = vector.load %arg1[%c1, %c0_96, %c0_97] : memref<2x16x32xf32, #tpu.memory_space<vmem>>, vector<1x16x32xf32>
    %130 = vector.shape_cast %129 : vector<1x16x32xf32> to vector<16x32xf32>
    %cst_98 = arith.constant 0.000000e+00 : f32
    %131 = vector.broadcast %cst_98 : f32 to vector<1x32xf32>
    %c7_99 = arith.constant 7 : index
    %c0_100 = arith.constant 0 : index
    %132 = vector.load %arg15[%c7_99, %c0_100] : memref<32x32xf32, #tpu.memory_space<vmem>>, vector<1x32xf32>
    tpu.vector_store %arg15[%c7_99, %c0_100], %131 {strides = array<i32>} : memref<32x32xf32, #tpu.memory_space<vmem>>, vector<1x32xf32>,
    %c24_101 = arith.constant 24 : index
    %c0_102 = arith.constant 0 : index
    %133 = vector.load %arg15[%c24_101, %c0_102] : memref<32x32xf32, #tpu.memory_space<vmem>>, vector<1x32xf32>
    tpu.vector_store %arg15[%c24_101, %c0_102], %131 {strides = array<i32>} : memref<32x32xf32, #tpu.memory_space<vmem>>, vector<1x32xf32>,
    %c8_103 = arith.constant 8 : index
    %c0_104 = arith.constant 0 : index
    %134 = vector.load %arg15[%c8_103, %c0_104] : memref<32x32xf32, #tpu.memory_space<vmem>>, vector<16x32xf32>
    tpu.vector_store %arg15[%c8_103, %c0_104], %130 {strides = array<i32>} : memref<32x32xf32, #tpu.memory_space<vmem>>, vector<16x32xf32>,
    %c7_105 = arith.constant 7 : index
    %c0_106 = arith.constant 0 : index
    %135 = tpu.strided_load %arg15[%c7_105, %c0_106] {strides = array<i32: 2, 1>} : memref<32x32xf32, #tpu.memory_space<vmem>>, vector<8x32xf32>
    %c8_107 = arith.constant 8 : index
    %c0_108 = arith.constant 0 : index
    %136 = tpu.strided_load %arg15[%c8_107, %c0_108] {strides = array<i32: 2, 1>} : memref<32x32xf32, #tpu.memory_space<vmem>>, vector<8x32xf32>
    %c9_109 = arith.constant 9 : index
    %c0_110 = arith.constant 0 : index
    %137 = tpu.strided_load %arg15[%c9_109, %c0_110] {strides = array<i32: 2, 1>} : memref<32x32xf32, #tpu.memory_space<vmem>>, vector<8x32xf32>
    %c10_111 = arith.constant 10 : index
    %c0_112 = arith.constant 0 : index
    %138 = tpu.strided_load %arg15[%c10_111, %c0_112] {strides = array<i32: 2, 1>} : memref<32x32xf32, #tpu.memory_space<vmem>>, vector<8x32xf32>
    %139 = tpu.concatenate %135, %136, %137, %138 in 1 : vector<8x32xf32>, vector<8x32xf32>, vector<8x32xf32>, vector<8x32xf32> -> vector<8x128xf32>
    %140 = arith.truncf %139 : vector<8x128xf32> to vector<8x128xbf16>
    %c0_113 = arith.constant 0 : index
    %c0_114 = arith.constant 0 : index
    %141 = vector.load %arg2[%c0_113, %c0_114] : memref<128x32xbf16, #tpu.memory_space<vmem>>, vector<128x32xbf16>
    %cst_115 = arith.constant dense<0.000000e+00> : vector<8x32xf32>
    %142 = tpu.matmul %140, %141, %cst_115 {dimension_numbers = #tpu.dot_dimension_numbers<[1], [0], [0], [1], [0, 0, 1, 1], [], []>} : vector<8x128xbf16>, vector<128x32xbf16>, vector<8x32xf32> -> vector<8x32xf32>
    %c0_116 = arith.constant 0 : index
    %c0_117 = arith.constant 0 : index
    %143 = vector.load %arg3[%c0_116, %c0_117] : memref<1x32xf32, #tpu.memory_space<vmem>>, vector<1x32xf32>
    %144 = vector.broadcast %143 : vector<1x32xf32> to vector<8x32xf32>
    %145 = arith.addf %142, %144 : vector<8x32xf32>
    %cst_118 = arith.constant 0.000000e+00 : f32
    %146 = vector.broadcast %cst_118 : f32 to vector<8x32xf32>
    %147 = arith.cmpf oge, %145, %146 : vector<8x32xf32>
    %cst_119 = arith.constant 2.000000e-01 : f32
    %148 = vector.broadcast %cst_119 : f32 to vector<8x32xf32>
    %149 = arith.mulf %148, %145 : vector<8x32xf32>
    %150 = arith.select %147, %145, %149 : vector<8x32xi1>, vector<8x32xf32>
    %151 = arith.truncf %150 : vector<8x32xf32> to vector<8x32xbf16>
    %c0_120 = arith.constant 0 : index
    %c0_121 = arith.constant 0 : index
    %152 = vector.load %arg4[%c0_120, %c0_121] : memref<96x32xbf16, #tpu.memory_space<vmem>>, vector<32x32xbf16>
    %cst_122 = arith.constant dense<0.000000e+00> : vector<8x32xf32>
    %153 = tpu.matmul %151, %152, %cst_122 {dimension_numbers = #tpu.dot_dimension_numbers<[1], [0], [0], [1], [0, 0, 1, 1], [], []>} : vector<8x32xbf16>, vector<32x32xbf16>, vector<8x32xf32> -> vector<8x32xf32>
    %c32_123 = arith.constant 32 : index
    %c0_124 = arith.constant 0 : index
    %154 = vector.load %arg4[%c32_123, %c0_124] : memref<96x32xbf16, #tpu.memory_space<vmem>>, vector<32x32xbf16>
    %cst_125 = arith.constant dense<0.000000e+00> : vector<8x32xf32>
    %155 = tpu.matmul %151, %154, %cst_125 {dimension_numbers = #tpu.dot_dimension_numbers<[1], [0], [0], [1], [0, 0, 1, 1], [], []>} : vector<8x32xbf16>, vector<32x32xbf16>, vector<8x32xf32> -> vector<8x32xf32>
    %c64_126 = arith.constant 64 : index
    %c0_127 = arith.constant 0 : index
    %156 = vector.load %arg4[%c64_126, %c0_127] : memref<96x32xbf16, #tpu.memory_space<vmem>>, vector<32x32xbf16>
    %cst_128 = arith.constant dense<0.000000e+00> : vector<8x32xf32>
    %157 = tpu.matmul %151, %156, %cst_128 {dimension_numbers = #tpu.dot_dimension_numbers<[1], [0], [0], [1], [0, 0, 1, 1], [], []>} : vector<8x32xbf16>, vector<32x32xbf16>, vector<8x32xf32> -> vector<8x32xf32>
    %cst_129 = arith.constant 0.000000e+00 : f32
    %158 = vector.broadcast %cst_129 : f32 to vector<1x32xf32>
    %159 = vector.extract_strided_slice %153 {offsets = [0, 0], sizes = [7, 32], strides = [1, 1]} : vector<8x32xf32> to vector<7x32xf32>
    %160 = tpu.concatenate %158, %159 in 0 : vector<1x32xf32>, vector<7x32xf32> -> vector<8x32xf32>
    %161 = arith.addf %160, %155 : vector<8x32xf32>
    %cst_130 = arith.constant 0.000000e+00 : f32
    %162 = vector.broadcast %cst_130 : f32 to vector<1x32xf32>
    %163 = vector.extract_strided_slice %157 {offsets = [1, 0], sizes = [7, 32], strides = [1, 1]} : vector<8x32xf32> to vector<7x32xf32>
    %164 = tpu.concatenate %163, %162 in 0 : vector<7x32xf32>, vector<1x32xf32> -> vector<8x32xf32>
    %165 = arith.addf %161, %164 : vector<8x32xf32>
    %c0_131 = arith.constant 0 : index
    %c0_132 = arith.constant 0 : index
    %166 = vector.load %arg5[%c0_131, %c0_132] : memref<1x32xf32, #tpu.memory_space<vmem>>, vector<1x32xf32>
    %167 = vector.broadcast %166 : vector<1x32xf32> to vector<8x32xf32>
    %168 = arith.addf %165, %167 : vector<8x32xf32>
    %cst_133 = arith.constant 0.000000e+00 : f32
    %169 = vector.broadcast %cst_133 : f32 to vector<8x32xf32>
    %170 = arith.cmpf oge, %168, %169 : vector<8x32xf32>
    %cst_134 = arith.constant 2.000000e-01 : f32
    %171 = vector.broadcast %cst_134 : f32 to vector<8x32xf32>
    %172 = arith.mulf %171, %168 : vector<8x32xf32>
    %173 = arith.select %170, %168, %172 : vector<8x32xi1>, vector<8x32xf32>
    %174 = arith.truncf %173 : vector<8x32xf32> to vector<8x32xbf16>
    %c0_135 = arith.constant 0 : index
    %c0_136 = arith.constant 0 : index
    %175 = vector.load %arg6[%c0_135, %c0_136] : memref<96x32xbf16, #tpu.memory_space<vmem>>, vector<32x32xbf16>
    %cst_137 = arith.constant dense<0.000000e+00> : vector<8x32xf32>
    %176 = tpu.matmul %174, %175, %cst_137 {dimension_numbers = #tpu.dot_dimension_numbers<[1], [0], [0], [1], [0, 0, 1, 1], [], []>} : vector<8x32xbf16>, vector<32x32xbf16>, vector<8x32xf32> -> vector<8x32xf32>
    %c32_138 = arith.constant 32 : index
    %c0_139 = arith.constant 0 : index
    %177 = vector.load %arg6[%c32_138, %c0_139] : memref<96x32xbf16, #tpu.memory_space<vmem>>, vector<32x32xbf16>
    %cst_140 = arith.constant dense<0.000000e+00> : vector<8x32xf32>
    %178 = tpu.matmul %174, %177, %cst_140 {dimension_numbers = #tpu.dot_dimension_numbers<[1], [0], [0], [1], [0, 0, 1, 1], [], []>} : vector<8x32xbf16>, vector<32x32xbf16>, vector<8x32xf32> -> vector<8x32xf32>
    %c64_141 = arith.constant 64 : index
    %c0_142 = arith.constant 0 : index
    %179 = vector.load %arg6[%c64_141, %c0_142] : memref<96x32xbf16, #tpu.memory_space<vmem>>, vector<32x32xbf16>
    %cst_143 = arith.constant dense<0.000000e+00> : vector<8x32xf32>
    %180 = tpu.matmul %174, %179, %cst_143 {dimension_numbers = #tpu.dot_dimension_numbers<[1], [0], [0], [1], [0, 0, 1, 1], [], []>} : vector<8x32xbf16>, vector<32x32xbf16>, vector<8x32xf32> -> vector<8x32xf32>
    %cst_144 = arith.constant 0.000000e+00 : f32
    %181 = vector.broadcast %cst_144 : f32 to vector<1x32xf32>
    %182 = vector.extract_strided_slice %176 {offsets = [0, 0], sizes = [7, 32], strides = [1, 1]} : vector<8x32xf32> to vector<7x32xf32>
    %183 = tpu.concatenate %181, %182 in 0 : vector<1x32xf32>, vector<7x32xf32> -> vector<8x32xf32>
    %184 = arith.addf %183, %178 : vector<8x32xf32>
    %cst_145 = arith.constant 0.000000e+00 : f32
    %185 = vector.broadcast %cst_145 : f32 to vector<1x32xf32>
    %186 = vector.extract_strided_slice %180 {offsets = [1, 0], sizes = [7, 32], strides = [1, 1]} : vector<8x32xf32> to vector<7x32xf32>
    %187 = tpu.concatenate %186, %185 in 0 : vector<7x32xf32>, vector<1x32xf32> -> vector<8x32xf32>
    %188 = arith.addf %184, %187 : vector<8x32xf32>
    %c0_146 = arith.constant 0 : index
    %c0_147 = arith.constant 0 : index
    %189 = vector.load %arg7[%c0_146, %c0_147] : memref<1x32xf32, #tpu.memory_space<vmem>>, vector<1x32xf32>
    %190 = vector.broadcast %189 : vector<1x32xf32> to vector<8x32xf32>
    %191 = arith.addf %188, %190 : vector<8x32xf32>
    %192 = arith.addf %191, %150 : vector<8x32xf32>
    %cst_148 = arith.constant 0.000000e+00 : f32
    %193 = vector.broadcast %cst_148 : f32 to vector<1x32xf32>
    %c7_149 = arith.constant 7 : index
    %c0_150 = arith.constant 0 : index
    %194 = vector.load %arg15[%c7_149, %c0_150] : memref<32x32xf32, #tpu.memory_space<vmem>>, vector<1x32xf32>
    tpu.vector_store %arg15[%c7_149, %c0_150], %193 {strides = array<i32>} : memref<32x32xf32, #tpu.memory_space<vmem>>, vector<1x32xf32>,
    %c16_151 = arith.constant 16 : index
    %c0_152 = arith.constant 0 : index
    %195 = vector.load %arg15[%c16_151, %c0_152] : memref<32x32xf32, #tpu.memory_space<vmem>>, vector<1x32xf32>
    tpu.vector_store %arg15[%c16_151, %c0_152], %193 {strides = array<i32>} : memref<32x32xf32, #tpu.memory_space<vmem>>, vector<1x32xf32>,
    %c8_153 = arith.constant 8 : index
    %c0_154 = arith.constant 0 : index
    %196 = vector.load %arg15[%c8_153, %c0_154] : memref<32x32xf32, #tpu.memory_space<vmem>>, vector<8x32xf32>
    tpu.vector_store %arg15[%c8_153, %c0_154], %192 {strides = array<i32>} : memref<32x32xf32, #tpu.memory_space<vmem>>, vector<8x32xf32>,
    %c7_155 = arith.constant 7 : index
    %c0_156 = arith.constant 0 : index
    %197 = tpu.strided_load %arg15[%c7_155, %c0_156] {strides = array<i32: 2, 1>} : memref<32x32xf32, #tpu.memory_space<vmem>>, vector<4x32xf32>
    %c8_157 = arith.constant 8 : index
    %c0_158 = arith.constant 0 : index
    %198 = tpu.strided_load %arg15[%c8_157, %c0_158] {strides = array<i32: 2, 1>} : memref<32x32xf32, #tpu.memory_space<vmem>>, vector<4x32xf32>
    %c9_159 = arith.constant 9 : index
    %c0_160 = arith.constant 0 : index
    %199 = tpu.strided_load %arg15[%c9_159, %c0_160] {strides = array<i32: 2, 1>} : memref<32x32xf32, #tpu.memory_space<vmem>>, vector<4x32xf32>
    %c10_161 = arith.constant 10 : index
    %c0_162 = arith.constant 0 : index
    %200 = tpu.strided_load %arg15[%c10_161, %c0_162] {strides = array<i32: 2, 1>} : memref<32x32xf32, #tpu.memory_space<vmem>>, vector<4x32xf32>
    %201 = tpu.concatenate %197, %198, %199, %200 in 1 : vector<4x32xf32>, vector<4x32xf32>, vector<4x32xf32>, vector<4x32xf32> -> vector<4x128xf32>
    %202 = arith.truncf %201 : vector<4x128xf32> to vector<4x128xbf16>
    %c0_163 = arith.constant 0 : index
    %c0_164 = arith.constant 0 : index
    %203 = vector.load %arg8[%c0_163, %c0_164] : memref<128x32xbf16, #tpu.memory_space<vmem>>, vector<128x32xbf16>
    %cst_165 = arith.constant dense<0.000000e+00> : vector<4x32xf32>
    %204 = tpu.matmul %202, %203, %cst_165 {dimension_numbers = #tpu.dot_dimension_numbers<[1], [0], [0], [1], [0, 0, 1, 1], [], []>} : vector<4x128xbf16>, vector<128x32xbf16>, vector<4x32xf32> -> vector<4x32xf32>
    %c0_166 = arith.constant 0 : index
    %c0_167 = arith.constant 0 : index
    %205 = vector.load %arg9[%c0_166, %c0_167] : memref<1x32xf32, #tpu.memory_space<vmem>>, vector<1x32xf32>
    %206 = vector.broadcast %205 : vector<1x32xf32> to vector<4x32xf32>
    %207 = arith.addf %204, %206 : vector<4x32xf32>
    %cst_168 = arith.constant 0.000000e+00 : f32
    %208 = vector.broadcast %cst_168 : f32 to vector<4x32xf32>
    %209 = arith.cmpf oge, %207, %208 : vector<4x32xf32>
    %cst_169 = arith.constant 2.000000e-01 : f32
    %210 = vector.broadcast %cst_169 : f32 to vector<4x32xf32>
    %211 = arith.mulf %210, %207 : vector<4x32xf32>
    %212 = arith.select %209, %207, %211 : vector<4x32xi1>, vector<4x32xf32>
    %213 = arith.truncf %212 : vector<4x32xf32> to vector<4x32xbf16>
    %c0_170 = arith.constant 0 : index
    %c0_171 = arith.constant 0 : index
    %214 = vector.load %arg10[%c0_170, %c0_171] : memref<96x32xbf16, #tpu.memory_space<vmem>>, vector<32x32xbf16>
    %cst_172 = arith.constant dense<0.000000e+00> : vector<4x32xf32>
    %215 = tpu.matmul %213, %214, %cst_172 {dimension_numbers = #tpu.dot_dimension_numbers<[1], [0], [0], [1], [0, 0, 1, 1], [], []>} : vector<4x32xbf16>, vector<32x32xbf16>, vector<4x32xf32> -> vector<4x32xf32>
    %c32_173 = arith.constant 32 : index
    %c0_174 = arith.constant 0 : index
    %216 = vector.load %arg10[%c32_173, %c0_174] : memref<96x32xbf16, #tpu.memory_space<vmem>>, vector<32x32xbf16>
    %cst_175 = arith.constant dense<0.000000e+00> : vector<4x32xf32>
    %217 = tpu.matmul %213, %216, %cst_175 {dimension_numbers = #tpu.dot_dimension_numbers<[1], [0], [0], [1], [0, 0, 1, 1], [], []>} : vector<4x32xbf16>, vector<32x32xbf16>, vector<4x32xf32> -> vector<4x32xf32>
    %c64_176 = arith.constant 64 : index
    %c0_177 = arith.constant 0 : index
    %218 = vector.load %arg10[%c64_176, %c0_177] : memref<96x32xbf16, #tpu.memory_space<vmem>>, vector<32x32xbf16>
    %cst_178 = arith.constant dense<0.000000e+00> : vector<4x32xf32>
    %219 = tpu.matmul %213, %218, %cst_178 {dimension_numbers = #tpu.dot_dimension_numbers<[1], [0], [0], [1], [0, 0, 1, 1], [], []>} : vector<4x32xbf16>, vector<32x32xbf16>, vector<4x32xf32> -> vector<4x32xf32>
    %cst_179 = arith.constant 0.000000e+00 : f32
    %220 = vector.broadcast %cst_179 : f32 to vector<1x32xf32>
    %221 = vector.extract_strided_slice %215 {offsets = [0, 0], sizes = [3, 32], strides = [1, 1]} : vector<4x32xf32> to vector<3x32xf32>
    %222 = tpu.concatenate %220, %221 in 0 : vector<1x32xf32>, vector<3x32xf32> -> vector<4x32xf32>
    %223 = arith.addf %222, %217 : vector<4x32xf32>
    %cst_180 = arith.constant 0.000000e+00 : f32
    %224 = vector.broadcast %cst_180 : f32 to vector<1x32xf32>
    %225 = vector.extract_strided_slice %219 {offsets = [1, 0], sizes = [3, 32], strides = [1, 1]} : vector<4x32xf32> to vector<3x32xf32>
    %226 = tpu.concatenate %225, %224 in 0 : vector<3x32xf32>, vector<1x32xf32> -> vector<4x32xf32>
    %227 = arith.addf %223, %226 : vector<4x32xf32>
    %c0_181 = arith.constant 0 : index
    %c0_182 = arith.constant 0 : index
    %228 = vector.load %arg11[%c0_181, %c0_182] : memref<1x32xf32, #tpu.memory_space<vmem>>, vector<1x32xf32>
    %229 = vector.broadcast %228 : vector<1x32xf32> to vector<4x32xf32>
    %230 = arith.addf %227, %229 : vector<4x32xf32>
    %cst_183 = arith.constant 0.000000e+00 : f32
    %231 = vector.broadcast %cst_183 : f32 to vector<4x32xf32>
    %232 = arith.cmpf oge, %230, %231 : vector<4x32xf32>
    %cst_184 = arith.constant 2.000000e-01 : f32
    %233 = vector.broadcast %cst_184 : f32 to vector<4x32xf32>
    %234 = arith.mulf %233, %230 : vector<4x32xf32>
    %235 = arith.select %232, %230, %234 : vector<4x32xi1>, vector<4x32xf32>
    %236 = arith.truncf %235 : vector<4x32xf32> to vector<4x32xbf16>
    %c0_185 = arith.constant 0 : index
    %c0_186 = arith.constant 0 : index
    %237 = vector.load %arg12[%c0_185, %c0_186] : memref<96x32xbf16, #tpu.memory_space<vmem>>, vector<32x32xbf16>
    %cst_187 = arith.constant dense<0.000000e+00> : vector<4x32xf32>
    %238 = tpu.matmul %236, %237, %cst_187 {dimension_numbers = #tpu.dot_dimension_numbers<[1], [0], [0], [1], [0, 0, 1, 1], [], []>} : vector<4x32xbf16>, vector<32x32xbf16>, vector<4x32xf32> -> vector<4x32xf32>
    %c32_188 = arith.constant 32 : index
    %c0_189 = arith.constant 0 : index
    %239 = vector.load %arg12[%c32_188, %c0_189] : memref<96x32xbf16, #tpu.memory_space<vmem>>, vector<32x32xbf16>
    %cst_190 = arith.constant dense<0.000000e+00> : vector<4x32xf32>
    %240 = tpu.matmul %236, %239, %cst_190 {dimension_numbers = #tpu.dot_dimension_numbers<[1], [0], [0], [1], [0, 0, 1, 1], [], []>} : vector<4x32xbf16>, vector<32x32xbf16>, vector<4x32xf32> -> vector<4x32xf32>
    %c64_191 = arith.constant 64 : index
    %c0_192 = arith.constant 0 : index
    %241 = vector.load %arg12[%c64_191, %c0_192] : memref<96x32xbf16, #tpu.memory_space<vmem>>, vector<32x32xbf16>
    %cst_193 = arith.constant dense<0.000000e+00> : vector<4x32xf32>
    %242 = tpu.matmul %236, %241, %cst_193 {dimension_numbers = #tpu.dot_dimension_numbers<[1], [0], [0], [1], [0, 0, 1, 1], [], []>} : vector<4x32xbf16>, vector<32x32xbf16>, vector<4x32xf32> -> vector<4x32xf32>
    %cst_194 = arith.constant 0.000000e+00 : f32
    %243 = vector.broadcast %cst_194 : f32 to vector<1x32xf32>
    %244 = vector.extract_strided_slice %238 {offsets = [0, 0], sizes = [3, 32], strides = [1, 1]} : vector<4x32xf32> to vector<3x32xf32>
    %245 = tpu.concatenate %243, %244 in 0 : vector<1x32xf32>, vector<3x32xf32> -> vector<4x32xf32>
    %246 = arith.addf %245, %240 : vector<4x32xf32>
    %cst_195 = arith.constant 0.000000e+00 : f32
    %247 = vector.broadcast %cst_195 : f32 to vector<1x32xf32>
    %248 = vector.extract_strided_slice %242 {offsets = [1, 0], sizes = [3, 32], strides = [1, 1]} : vector<4x32xf32> to vector<3x32xf32>
    %249 = tpu.concatenate %248, %247 in 0 : vector<3x32xf32>, vector<1x32xf32> -> vector<4x32xf32>
    %250 = arith.addf %246, %249 : vector<4x32xf32>
    %c0_196 = arith.constant 0 : index
    %c0_197 = arith.constant 0 : index
    %251 = vector.load %arg13[%c0_196, %c0_197] : memref<1x32xf32, #tpu.memory_space<vmem>>, vector<1x32xf32>
    %252 = vector.broadcast %251 : vector<1x32xf32> to vector<4x32xf32>
    %253 = arith.addf %250, %252 : vector<4x32xf32>
    %254 = arith.addf %253, %212 : vector<4x32xf32>
    %c1_198 = arith.constant 1 : index
    %c0_199 = arith.constant 0 : index
    %c0_200 = arith.constant 0 : index
    %255 = vector.load %arg14[%c1_198, %c0_199, %c0_200] : memref<2x4x32xf32, #tpu.memory_space<vmem>>, vector<1x4x32xf32>
    %256 = vector.shape_cast %255 : vector<1x4x32xf32> to vector<4x32xf32>
    %257 = vector.shape_cast %254 : vector<4x32xf32> to vector<1x4x32xf32>
    tpu.vector_store %arg14[%c1_198, %c0_199, %c0_200], %257 {strides = array<i32>} : memref<2x4x32xf32, #tpu.memory_space<vmem>>, vector<1x4x32xf32>,
    return
  }
  func.func @transform_0(%arg0: i32) -> (i32, i32, i32) {
    %c0_i32 = arith.constant 0 : i32
    %c0_i32_0 = arith.constant 0 : i32
    %c0_i32_1 = arith.constant 0 : i32
    return %arg0, %c0_i32, %c0_i32_0 : i32, i32, i32
  }
  func.func @transform_1(%arg0: i32) -> (i32, i32) {
    %c0_i32 = arith.constant 0 : i32
    %c0_i32_0 = arith.constant 0 : i32
    %c0_i32_1 = arith.constant 0 : i32
    return %c0_i32, %c0_i32_0 : i32, i32
  }
  func.func @transform_2(%arg0: i32) -> (i32, i32) {
    %c0_i32 = arith.constant 0 : i32
    %c0_i32_0 = arith.constant 0 : i32
    %c0_i32_1 = arith.constant 0 : i32
    return %c0_i32, %c0_i32_0 : i32, i32
  }
  func.func @transform_3(%arg0: i32) -> (i32, i32) {
    %c0_i32 = arith.constant 0 : i32
    %c0_i32_0 = arith.constant 0 : i32
    %c0_i32_1 = arith.constant 0 : i32
    return %c0_i32, %c0_i32_0 : i32, i32
  }
  func.func @transform_4(%arg0: i32) -> (i32, i32) {
    %c0_i32 = arith.constant 0 : i32
    %c0_i32_0 = arith.constant 0 : i32
    %c0_i32_1 = arith.constant 0 : i32
    return %c0_i32, %c0_i32_0 : i32, i32
  }
  func.func @transform_5(%arg0: i32) -> (i32, i32) {
    %c0_i32 = arith.constant 0 : i32
    %c0_i32_0 = arith.constant 0 : i32
    %c0_i32_1 = arith.constant 0 : i32
    return %c0_i32, %c0_i32_0 : i32, i32
  }
  func.func @transform_6(%arg0: i32) -> (i32, i32) {
    %c0_i32 = arith.constant 0 : i32
    %c0_i32_0 = arith.constant 0 : i32
    %c0_i32_1 = arith.constant 0 : i32
    return %c0_i32, %c0_i32_0 : i32, i32
  }
  func.func @transform_7(%arg0: i32) -> (i32, i32) {
    %c0_i32 = arith.constant 0 : i32
    %c0_i32_0 = arith.constant 0 : i32
    %c0_i32_1 = arith.constant 0 : i32
    return %c0_i32, %c0_i32_0 : i32, i32
  }
  func.func @transform_8(%arg0: i32) -> (i32, i32) {
    %c0_i32 = arith.constant 0 : i32
    %c0_i32_0 = arith.constant 0 : i32
    %c0_i32_1 = arith.constant 0 : i32
    return %c0_i32, %c0_i32_0 : i32, i32
  }
  func.func @transform_9(%arg0: i32) -> (i32, i32) {
    %c0_i32 = arith.constant 0 : i32
    %c0_i32_0 = arith.constant 0 : i32
    %c0_i32_1 = arith.constant 0 : i32
    return %c0_i32, %c0_i32_0 : i32, i32
  }
  func.func @transform_10(%arg0: i32) -> (i32, i32) {
    %c0_i32 = arith.constant 0 : i32
    %c0_i32_0 = arith.constant 0 : i32
    %c0_i32_1 = arith.constant 0 : i32
    return %c0_i32, %c0_i32_0 : i32, i32
  }
  func.func @transform_11(%arg0: i32) -> (i32, i32) {
    %c0_i32 = arith.constant 0 : i32
    %c0_i32_0 = arith.constant 0 : i32
    %c0_i32_1 = arith.constant 0 : i32
    return %c0_i32, %c0_i32_0 : i32, i32
  }
  func.func @transform_12(%arg0: i32) -> (i32, i32) {
    %c0_i32 = arith.constant 0 : i32
    %c0_i32_0 = arith.constant 0 : i32
    %c0_i32_1 = arith.constant 0 : i32
    return %c0_i32, %c0_i32_0 : i32, i32
  }
  func.func @transform_13(%arg0: i32) -> (i32, i32, i32) {
    %c0_i32 = arith.constant 0 : i32
    %c0_i32_0 = arith.constant 0 : i32
    %c0_i32_1 = arith.constant 0 : i32
    return %arg0, %c0_i32, %c0_i32_0 : i32, i32, i32
  }
}

</mosaic_0001>

<llo_original>
// kernel: tpu_custom_call.1
$region0: #{tpu_custom_call.1}
  #allocation0 [shape = 'u32[]', space=smem, size = 0x4, offset = 0x4, fixed_abs, tag = 'smem constant byte address 0x4 - core index']
  #allocation1 [shape = 'u32[144,128]{1,0:T(1,128)}', space=vmem, size = 0x12000, scoped, tag = 'internal scratch']
  #allocation2 [shape = 'f32[32,32]{1,0:T(8,128)}', space=vmem, size = 0x4000, scoped, tag = 'scratch operand']
  %s0 = inlined_call_operand.vmem [shape: f32[2,16,32], index: 0, kind: input, shape index: {}]
  %s1 = inlined_call_operand.vmem [shape: bf16[128,32], index: 1, kind: input, shape index: {}]
  %s2 = inlined_call_operand.vmem [shape: f32[1,32], index: 2, kind: input, shape index: {}]
  %s3 = inlined_call_operand.vmem [shape: bf16[96,32], index: 3, kind: input, shape index: {}]
  %s4 = inlined_call_operand.vmem [shape: f32[1,32], index: 4, kind: input, shape index: {}]
  %s5 = inlined_call_operand.vmem [shape: bf16[96,32], index: 5, kind: input, shape index: {}]
  %s6 = inlined_call_operand.vmem [shape: f32[1,32], index: 6, kind: input, shape index: {}]
  %s7 = inlined_call_operand.vmem [shape: bf16[128,32], index: 7, kind: input, shape index: {}]
  %s8 = inlined_call_operand.vmem [shape: f32[1,32], index: 8, kind: input, shape index: {}]
  %s9 = inlined_call_operand.vmem [shape: bf16[96,32], index: 9, kind: input, shape index: {}]
  %s10 = inlined_call_operand.vmem [shape: f32[1,32], index: 10, kind: input, shape index: {}]
  %s11 = inlined_call_operand.vmem [shape: bf16[96,32], index: 11, kind: input, shape index: {}]
  %s12 = inlined_call_operand.vmem [shape: f32[1,32], index: 12, kind: input, shape index: {}]
  %s13 = inlined_call_operand.hbm [shape: f32[2,4,32], index: 13, kind: output, shape index: {}]
  %s14 = sld [smem:[#allocation0]]
  $region62: #{tpu_custom_call.1} parent=0
    _
  %s16 = ssub.s32 1, %s14
  %s17 = scalar_select 0, %s16, %s14
  $region1: #{tpu_custom_call.1} parent=0
    #allocation3 [shape = 'u8[4096]{0}', space=vmem, size = 0x1000, scoped, tag = 'output window, operand 0, single buffered']
    #allocation4 [shape = 's32[1]{0}', space=sflag, size = 0x4, scoped, tag = 'scoped memory for tpu_custom_call.1']
    %18 = vsyncpa [#allocation4], 0
    // Predicated region
    $region2: #{tpu_custom_call.1} parent=1 // pred_check
      _
    $region3: #{tpu_custom_call.1} parent=1 // pred_check_branch
      %20 = sbr.rel (0) target = $region5
    $region4: #{tpu_custom_call.1} parent=1 // pred_region
      _
    $region5: #{tpu_custom_call.1} parent=1 // pred_fallthru
      _
    // Predicated region
    $region6: #{tpu_custom_call.1} parent=1 // pred_check
      _
    $region7: #{tpu_custom_call.1} parent=1 // pred_check_branch
      %22 = sbr.rel (0) target = $region9
    $region8: #{tpu_custom_call.1} parent=1 // pred_region
      _
    $region9: #{tpu_custom_call.1} parent=1 // pred_fallthru
      _
    // Predicated region
    $region10: #{tpu_custom_call.1} parent=1 // pred_check
      _
    $region11: #{tpu_custom_call.1} parent=1 // pred_check_branch
      %24 = sbr.rel (0) target = $region13
    $region12: #{tpu_custom_call.1} parent=1 // pred_region
      _
    $region13: #{tpu_custom_call.1} parent=1 // pred_fallthru
      _
    // Predicated region
    $region14: #{tpu_custom_call.1} parent=1 // pred_check
      _
    $region15: #{tpu_custom_call.1} parent=1 // pred_check_branch
      %26 = sbr.rel (0) target = $region17
    $region16: #{tpu_custom_call.1} parent=1 // pred_region
      _
    $region17: #{tpu_custom_call.1} parent=1 // pred_fallthru
      _
    // Predicated region
    $region18: #{tpu_custom_call.1} parent=1 // pred_check
      _
    $region19: #{tpu_custom_call.1} parent=1 // pred_check_branch
      %28 = sbr.rel (0) target = $region21
    $region20: #{tpu_custom_call.1} parent=1 // pred_region
      _
    $region21: #{tpu_custom_call.1} parent=1 // pred_fallthru
      _
    // Predicated region
    $region22: #{tpu_custom_call.1} parent=1 // pred_check
      _
    $region23: #{tpu_custom_call.1} parent=1 // pred_check_branch
      %30 = sbr.rel (0) target = $region25
    $region24: #{tpu_custom_call.1} parent=1 // pred_region
      _
    $region25: #{tpu_custom_call.1} parent=1 // pred_fallthru
      _
    // Predicated region
    $region26: #{tpu_custom_call.1} parent=1 // pred_check
      _
    $region27: #{tpu_custom_call.1} parent=1 // pred_check_branch
      %32 = sbr.rel (0) target = $region29
    $region28: #{tpu_custom_call.1} parent=1 // pred_region
      _
    $region29: #{tpu_custom_call.1} parent=1 // pred_fallthru
      _
    // Predicated region
    $region30: #{tpu_custom_call.1} parent=1 // pred_check
      _
    $region31: #{tpu_custom_call.1} parent=1 // pred_check_branch
      %34 = sbr.rel (0) target = $region33
    $region32: #{tpu_custom_call.1} parent=1 // pred_region
      _
    $region33: #{tpu_custom_call.1} parent=1 // pred_fallthru
      _
    // Predicated region
    $region34: #{tpu_custom_call.1} parent=1 // pred_check
      _
    $region35: #{tpu_custom_call.1} parent=1 // pred_check_branch
      %36 = sbr.rel (0) target = $region37
    $region36: #{tpu_custom_call.1} parent=1 // pred_region
      _
    $region37: #{tpu_custom_call.1} parent=1 // pred_fallthru
      _
    // Predicated region
    $region38: #{tpu_custom_call.1} parent=1 // pred_check
      _
    $region39: #{tpu_custom_call.1} parent=1 // pred_check_branch
      %38 = sbr.rel (0) target = $region41
    $region40: #{tpu_custom_call.1} parent=1 // pred_region
      _
    $region41: #{tpu_custom_call.1} parent=1 // pred_fallthru
      _
    // Predicated region
    $region42: #{tpu_custom_call.1} parent=1 // pred_check
      _
    $region43: #{tpu_custom_call.1} parent=1 // pred_check_branch
      %40 = sbr.rel (0) target = $region45
    $region44: #{tpu_custom_call.1} parent=1 // pred_region
      _
    $region45: #{tpu_custom_call.1} parent=1 // pred_fallthru
      _
    // Predicated region
    $region46: #{tpu_custom_call.1} parent=1 // pred_check
      _
    $region47: #{tpu_custom_call.1} parent=1 // pred_check_branch
      %42 = sbr.rel (0) target = $region49
    $region48: #{tpu_custom_call.1} parent=1 // pred_region
      _
    $region49: #{tpu_custom_call.1} parent=1 // pred_fallthru
      _
    // Predicated region
    $region50: #{tpu_custom_call.1} parent=1 // pred_check
      _
    $region51: #{tpu_custom_call.1} parent=1 // pred_check_branch
      %44 = sbr.rel (0) target = $region53
    $region52: #{tpu_custom_call.1} parent=1 // pred_region
      _
    $region53: #{tpu_custom_call.1} parent=1 // pred_fallthru
      _
    %v46 = vld [vmem:[%s0] sm:$0xff]
    %v47 = vld [vmem:[%s0 + $0x8] sm:$0xff]
    %vm48 = vcmask 253952
    %49 = vst.msk [vmem:[#allocation2 + $0x7] sm:$0x1] %vm48, 0.0
    %50 = vst.msk [vmem:[#allocation2 + $0x18] sm:$0x1] %vm48, 0.0
    %vm51 = vcmask 261120
    %52 = vst.msk [vmem:[#allocation2 + $0x8] sm:$0xff] %vm51, %v46
    %53 = vst.msk [vmem:[#allocation2 + $0x10] sm:$0xff] %vm51, %v47
    %s54 = scalar_lea.vmem [#allocation2], 7
    %v55 = vld [vmem:[%s54] ss:$2 sm:$0xff]
    %s56 = scalar_lea.vmem [#allocation2], 8
    %v57 = vld [vmem:[%s56] ss:$2 sm:$0xff]
    %s58 = scalar_lea.vmem [#allocation2], 9
    %v59 = vld [vmem:[%s58] ss:$2 sm:$0xff]
    %s60 = scalar_lea.vmem [#allocation2], 10
    %v61 = vld [vmem:[%s60] ss:$2 sm:$0xff]
    %63 = vrot.lane.b32.xlu0 %v57, 32
    %v64 = vpop.permute.xlu0 %63
    %67 = vrot.lane.b32.xlu0 %v59, 64
    %v68 = vpop.permute.xlu0 %67
    %71 = vrot.lane.b32.xlu0 %v61, 96
    %v72 = vpop.permute.xlu0 %71
    %v74 = vsel %vm51, %v55, %v64
    %vm75 = vcmask 523264
    %v76 = vsel %vm75, %v74, %v68
    %vm77 = vcmask 785408
    %v78 = vsel %vm77, %v76, %v72
    %v79 = vpack.c.bf16 %v78, %v78
    %v80 = vld [vmem:[%s1] sm:$0xf]
    %v81 = vld [vmem:[%s1 + $0x4] sm:$0xf]
    %v82 = vld [vmem:[%s1 + $0x8] sm:$0xf]
    %v83 = vld [vmem:[%s1 + $0xc] sm:$0xf]
    %v84 = vld [vmem:[%s1 + $0x10] sm:$0xf]
    %v85 = vld [vmem:[%s1 + $0x14] sm:$0xf]
    %v86 = vld [vmem:[%s1 + $0x18] sm:$0xf]
    %v87 = vld [vmem:[%s1 + $0x1c] sm:$0xf]
    %v88 = vld [vmem:[%s1 + $0x20] sm:$0xf]
    %v89 = vld [vmem:[%s1 + $0x24] sm:$0xf]
    %v90 = vld [vmem:[%s1 + $0x28] sm:$0xf]
    %v91 = vld [vmem:[%s1 + $0x2c] sm:$0xf]
    %v92 = vld [vmem:[%s1 + $0x30] sm:$0xf]
    %v93 = vld [vmem:[%s1 + $0x34] sm:$0xf]
    %v94 = vld [vmem:[%s1 + $0x38] sm:$0xf]
    %v95 = vld [vmem:[%s1 + $0x3c] sm:$0xf]
    %v96 = vld [vmem:[%s2] sm:$0x1]
    %v98 = vlaneseq
    %v99 = vshrl.u32 %v98, 7
    %v100 = vsub.s32 0, %v99
    %v101 = vrot.slane %v96, %v100
    %v119 = vunpack.c.l.b16 %v80
    %v120 = vunpack.c.l.b16 %v81
    %v121 = vunpack.c.l.b16 %v82
    %v122 = vunpack.c.l.b16 %v83
    %v123 = vunpack.c.l.b16 %v84
    %v124 = vunpack.c.l.b16 %v85
    %v125 = vunpack.c.l.b16 %v86
    %v126 = vunpack.c.l.b16 %v87
    %v127 = vunpack.c.l.b16 %v88
    %v128 = vunpack.c.l.b16 %v89
    %v129 = vunpack.c.l.b16 %v90
    %v130 = vunpack.c.l.b16 %v91
    %v131 = vunpack.c.l.b16 %v92
    %v132 = vunpack.c.l.b16 %v93
    %v133 = vunpack.c.l.b16 %v94
    %v134 = vunpack.c.l.b16 %v95
    %v135 = vpack.c.b16 %v120, %v119
    %v136 = vpack.c.b16 %v122, %v121
    %v137 = vpack.c.b16 %v124, %v123
    %v138 = vpack.c.b16 %v126, %v125
    %v139 = vpack.c.b16 %v128, %v127
    %v140 = vpack.c.b16 %v130, %v129
    %v141 = vpack.c.b16 %v132, %v131
    %v142 = vpack.c.b16 %v134, %v133
    %151 = vmatprep.subr.bf16.mxu0 0
    %152 = vmatpush1.bf16.msra.mxu0 %v135
    %153 = vmatprep.subr.bf16.mxu0 0
    %154 = vmatpush1.bf16.msra.mxu0 %v136
    %155 = vmatprep.subr.bf16.mxu0 0
    %156 = vmatpush1.bf16.msra.mxu0 %v137
    %157 = vmatprep.subr.bf16.mxu0 0
    %158 = vmatpush1.bf16.msra.mxu0 %v138
    %159 = vmatprep.subr.bf16.mxu0 0
    %160 = vmatpush1.bf16.msra.mxu0 %v139
    %161 = vmatprep.subr.bf16.mxu0 0
    %162 = vmatpush1.bf16.msra.mxu0 %v140
    %163 = vmatprep.subr.bf16.mxu0 0
    %164 = vmatpush1.bf16.msra.mxu0 %v141
    %165 = vmatprep.subr.bf16.mxu0 0
    %166 = vmatpush1.bf16.msra.mxu0 %v142
    %167 = vmatprep.subr.bf16.mxu0 0
    %168 = vmatpush1.bf16.msra.mxu0 0
    %169 = vmatprep.subr.bf16.mxu0 0
    %170 = vmatpush1.bf16.msra.mxu0 0
    %171 = vmatprep.subr.bf16.mxu0 0
    %172 = vmatpush1.bf16.msra.mxu0 0
    %173 = vmatprep.subr.bf16.mxu0 0
    %174 = vmatpush1.bf16.msra.mxu0 0
    %175 = vmatprep.subr.bf16.mxu0 0
    %176 = vmatpush1.bf16.msra.mxu0 0
    %177 = vmatprep.subr.bf16.mxu0 0
    %178 = vmatpush1.bf16.msra.mxu0 0
    %179 = vmatprep.subr.bf16.mxu0 0
    %180 = vmatpush1.bf16.msra.mxu0 0
    %181 = vmatprep.subr.bf16.mxu0 0
    %182 = vmatpush1.bf16.msra.mxu0 0
    %183 = vmatprep.mubr.bf16.mxu0 0
    %184 = vmatmul.mubr.bf16.gmra.mrb[0].mxu0 %v79
    %v185 = vpop.f32.mrb[0].mxu0
    %v186 = vadd.f32 %v101, %v185
    %v187 = vpop.f32.mrb[0].mxu0
    %v188 = vpop.f32.mrb[0].mxu0
    %v189 = vpop.f32.mrb[0].mxu0
    %190 = vdwg.mxu0
    %vm191 = vcmp.ge.f32.partialorder %v186, 0.0
    %v192 = vmul.f32 %v186, 0.2
    %v193 = vsel %vm191, %v186, %v192
    %v194 = vpack.c.bf16 %v193, %v193
    %v195 = vld [vmem:[%s3] sm:$0xf]
    %v196 = vld [vmem:[%s3 + $0x4] sm:$0xf]
    %v197 = vld [vmem:[%s3 + $0x8] sm:$0xf]
    %v198 = vld [vmem:[%s3 + $0xc] sm:$0xf]
    %v203 = vunpack.c.l.b16 %v195
    %v204 = vunpack.c.l.b16 %v196
    %v205 = vunpack.c.l.b16 %v197
    %v206 = vunpack.c.l.b16 %v198
    %v207 = vpack.c.b16 %v204, %v203
    %v208 = vpack.c.b16 %v206, %v205
    %v212 = vsel %vm51, %v194, 0
    %214 = vmatprep.subr.bf16.mxu0 0
    %215 = vmatpush1.bf16.msra.mxu0 %v207
    %216 = vmatprep.subr.bf16.mxu0 0
    %217 = vmatpush1.bf16.msra.mxu0 %v208
    %218 = vmatprep.subr.bf16.mxu0 0
    %219 = vmatpush1.bf16.msra.mxu0 0
    %220 = vmatprep.subr.bf16.mxu0 0
    %221 = vmatpush1.bf16.msra.mxu0 0
    %222 = vmatprep.subr.bf16.mxu0 0
    %223 = vmatpush1.bf16.msra.mxu0 0
    %224 = vmatprep.subr.bf16.mxu0 0
    %225 = vmatpush1.bf16.msra.mxu0 0
    %226 = vmatprep.subr.bf16.mxu0 0
    %227 = vmatpush1.bf16.msra.mxu0 0
    %228 = vmatprep.subr.bf16.mxu0 0
    %229 = vmatpush1.bf16.msra.mxu0 0
    %230 = vmatprep.subr.bf16.mxu0 0
    %231 = vmatpush1.bf16.msra.mxu0 0
    %232 = vmatprep.subr.bf16.mxu0 0
    %233 = vmatpush1.bf16.msra.mxu0 0
    %234 = vmatprep.subr.bf16.mxu0 0
    %235 = vmatpush1.bf16.msra.mxu0 0
    %236 = vmatprep.subr.bf16.mxu0 0
    %237 = vmatpush1.bf16.msra.mxu0 0
    %238 = vmatprep.subr.bf16.mxu0 0
    %239 = vmatpush1.bf16.msra.mxu0 0
    %240 = vmatprep.subr.bf16.mxu0 0
    %241 = vmatpush1.bf16.msra.mxu0 0
    %242 = vmatprep.subr.bf16.mxu0 0
    %243 = vmatpush1.bf16.msra.mxu0 0
    %244 = vmatprep.subr.bf16.mxu0 0
    %245 = vmatpush1.bf16.msra.mxu0 0
    %246 = vmatprep.mubr.bf16.mxu0 0
    %247 = vmatmul.mubr.bf16.gmra.mrb[0].mxu0 %v212
    %v248 = vpop.f32.mrb[0].mxu0
    %v249 = vadd.f32 0.0, %v248
    %v250 = vpop.f32.mrb[0].mxu0
    %v251 = vpop.f32.mrb[0].mxu0
    %v252 = vpop.f32.mrb[0].mxu0
    %253 = vdwg.mxu0
    %v254 = vld [vmem:[%s3 + $0x10] sm:$0xf]
    %v255 = vld [vmem:[%s3 + $0x14] sm:$0xf]
    %v256 = vld [vmem:[%s3 + $0x18] sm:$0xf]
    %v257 = vld [vmem:[%s3 + $0x1c] sm:$0xf]
    %v262 = vunpack.c.l.b16 %v254
    %v263 = vunpack.c.l.b16 %v255
    %v264 = vunpack.c.l.b16 %v256
    %v265 = vunpack.c.l.b16 %v257
    %v266 = vpack.c.b16 %v263, %v262
    %v267 = vpack.c.b16 %v265, %v264
    %270 = vmatprep.subr.bf16.mxu0 0
    %271 = vmatpush1.bf16.msra.mxu0 %v266
    %272 = vmatprep.subr.bf16.mxu0 0
    %273 = vmatpush1.bf16.msra.mxu0 %v267
    %274 = vmatprep.subr.bf16.mxu0 0
    %275 = vmatpush1.bf16.msra.mxu0 0
    %276 = vmatprep.subr.bf16.mxu0 0
    %277 = vmatpush1.bf16.msra.mxu0 0
    %278 = vmatprep.subr.bf16.mxu0 0
    %279 = vmatpush1.bf16.msra.mxu0 0
    %280 = vmatprep.subr.bf16.mxu0 0
    %281 = vmatpush1.bf16.msra.mxu0 0
    %282 = vmatprep.subr.bf16.mxu0 0
    %283 = vmatpush1.bf16.msra.mxu0 0
    %284 = vmatprep.subr.bf16.mxu0 0
    %285 = vmatpush1.bf16.msra.mxu0 0
    %286 = vmatprep.subr.bf16.mxu0 0
    %287 = vmatpush1.bf16.msra.mxu0 0
    %288 = vmatprep.subr.bf16.mxu0 0
    %289 = vmatpush1.bf16.msra.mxu0 0
    %290 = vmatprep.subr.bf16.mxu0 0
    %291 = vmatpush1.bf16.msra.mxu0 0
    %292 = vmatprep.subr.bf16.mxu0 0
    %293 = vmatpush1.bf16.msra.mxu0 0
    %294 = vmatprep.subr.bf16.mxu0 0
    %295 = vmatpush1.bf16.msra.mxu0 0
    %296 = vmatprep.subr.bf16.mxu0 0
    %297 = vmatpush1.bf16.msra.mxu0 0
    %298 = vmatprep.subr.bf16.mxu0 0
    %299 = vmatpush1.bf16.msra.mxu0 0
    %300 = vmatprep.subr.bf16.mxu0 0
    %301 = vmatpush1.bf16.msra.mxu0 0
    %302 = vmatprep.mubr.bf16.mxu0 0
    %303 = vmatmul.mubr.bf16.gmra.mrb[0].mxu0 %v212
    %v304 = vpop.f32.mrb[0].mxu0
    %v305 = vadd.f32 0.0, %v304
    %v306 = vpop.f32.mrb[0].mxu0
    %v307 = vpop.f32.mrb[0].mxu0
    %v308 = vpop.f32.mrb[0].mxu0
    %309 = vdwg.mxu0
    %v310 = vld [vmem:[%s3 + $0x20] sm:$0xf]
    %v311 = vld [vmem:[%s3 + $0x24] sm:$0xf]
    %v312 = vld [vmem:[%s3 + $0x28] sm:$0xf]
    %v313 = vld [vmem:[%s3 + $0x2c] sm:$0xf]
    %v318 = vunpack.c.l.b16 %v310
    %v319 = vunpack.c.l.b16 %v311
    %v320 = vunpack.c.l.b16 %v312
    %v321 = vunpack.c.l.b16 %v313
    %v322 = vpack.c.b16 %v319, %v318
    %v323 = vpack.c.b16 %v321, %v320
    %326 = vmatprep.subr.bf16.mxu0 0
    %327 = vmatpush1.bf16.msra.mxu0 %v322
    %328 = vmatprep.subr.bf16.mxu0 0
    %329 = vmatpush1.bf16.msra.mxu0 %v323
    %330 = vmatprep.subr.bf16.mxu0 0
    %331 = vmatpush1.bf16.msra.mxu0 0
    %332 = vmatprep.subr.bf16.mxu0 0
    %333 = vmatpush1.bf16.msra.mxu0 0
    %334 = vmatprep.subr.bf16.mxu0 0
    %335 = vmatpush1.bf16.msra.mxu0 0
    %336 = vmatprep.subr.bf16.mxu0 0
    %337 = vmatpush1.bf16.msra.mxu0 0
    %338 = vmatprep.subr.bf16.mxu0 0
    %339 = vmatpush1.bf16.msra.mxu0 0
    %340 = vmatprep.subr.bf16.mxu0 0
    %341 = vmatpush1.bf16.msra.mxu0 0
    %342 = vmatprep.subr.bf16.mxu0 0
    %343 = vmatpush1.bf16.msra.mxu0 0
    %344 = vmatprep.subr.bf16.mxu0 0
    %345 = vmatpush1.bf16.msra.mxu0 0
    %346 = vmatprep.subr.bf16.mxu0 0
    %347 = vmatpush1.bf16.msra.mxu0 0
    %348 = vmatprep.subr.bf16.mxu0 0
    %349 = vmatpush1.bf16.msra.mxu0 0
    %350 = vmatprep.subr.bf16.mxu0 0
    %351 = vmatpush1.bf16.msra.mxu0 0
    %352 = vmatprep.subr.bf16.mxu0 0
    %353 = vmatpush1.bf16.msra.mxu0 0
    %354 = vmatprep.subr.bf16.mxu0 0
    %355 = vmatpush1.bf16.msra.mxu0 0
    %356 = vmatprep.subr.bf16.mxu0 0
    %357 = vmatpush1.bf16.msra.mxu0 0
    %358 = vmatprep.mubr.bf16.mxu0 0
    %359 = vmatmul.mubr.bf16.gmra.mrb[0].mxu0 %v212
    %v360 = vpop.f32.mrb[0].mxu0
    %v361 = vadd.f32 0.0, %v360
    %v362 = vpop.f32.mrb[0].mxu0
    %v363 = vpop.f32.mrb[0].mxu0
    %v364 = vpop.f32.mrb[0].mxu0
    %365 = vdwg.mxu0
    %v367 = vrot.slane %v249, 7
    %vm369 = vcmask 1040384
    %v370 = vsel %vm369, 0.0, %v367
    %v371 = vadd.f32 %v370, %v305
    %v373 = vrot.slane %v361, 1
    %vm375 = vcmask 1046528
    %v376 = vsel %vm375, %v373, 0.0
    %v377 = vadd.f32 %v371, %v376
    %v378 = vld [vmem:[%s4] sm:$0x1]
    %v380 = vlaneseq
    %v381 = vshrl.u32 %v380, 7
    %v382 = vsub.s32 0, %v381
    %v383 = vrot.slane %v378, %v382
    %v385 = vadd.f32 %v377, %v383
    %vm386 = vcmp.ge.f32.partialorder %v385, 0.0
    %v387 = vmul.f32 %v385, 0.2
    %v388 = vsel %vm386, %v385, %v387
    %v389 = vpack.c.bf16 %v388, %v388
    %v390 = vld [vmem:[%s5] sm:$0xf]
    %v391 = vld [vmem:[%s5 + $0x4] sm:$0xf]
    %v392 = vld [vmem:[%s5 + $0x8] sm:$0xf]
    %v393 = vld [vmem:[%s5 + $0xc] sm:$0xf]
    %v398 = vunpack.c.l.b16 %v390
    %v399 = vunpack.c.l.b16 %v391
    %v400 = vunpack.c.l.b16 %v392
    %v401 = vunpack.c.l.b16 %v393
    %v402 = vpack.c.b16 %v399, %v398
    %v403 = vpack.c.b16 %v401, %v400
    %v407 = vsel %vm51, %v389, 0
    %409 = vmatprep.subr.bf16.mxu0 0
    %410 = vmatpush1.bf16.msra.mxu0 %v402
    %411 = vmatprep.subr.bf16.mxu0 0
    %412 = vmatpush1.bf16.msra.mxu0 %v403
    %413 = vmatprep.subr.bf16.mxu0 0
    %414 = vmatpush1.bf16.msra.mxu0 0
    %415 = vmatprep.subr.bf16.mxu0 0
    %416 = vmatpush1.bf16.msra.mxu0 0
    %417 = vmatprep.subr.bf16.mxu0 0
    %418 = vmatpush1.bf16.msra.mxu0 0
    %419 = vmatprep.subr.bf16.mxu0 0
    %420 = vmatpush1.bf16.msra.mxu0 0
    %421 = vmatprep.subr.bf16.mxu0 0
    %422 = vmatpush1.bf16.msra.mxu0 0
    %423 = vmatprep.subr.bf16.mxu0 0
    %424 = vmatpush1.bf16.msra.mxu0 0
    %425 = vmatprep.subr.bf16.mxu0 0
    %426 = vmatpush1.bf16.msra.mxu0 0
    %427 = vmatprep.subr.bf16.mxu0 0
    %428 = vmatpush1.bf16.msra.mxu0 0
    %429 = vmatprep.subr.bf16.mxu0 0
    %430 = vmatpush1.bf16.msra.mxu0 0
    %431 = vmatprep.subr.bf16.mxu0 0
    %432 = vmatpush1.bf16.msra.mxu0 0
    %433 = vmatprep.subr.bf16.mxu0 0
    %434 = vmatpush1.bf16.msra.mxu0 0
    %435 = vmatprep.subr.bf16.mxu0 0
    %436 = vmatpush1.bf16.msra.mxu0 0
    %437 = vmatprep.subr.bf16.mxu0 0
    %438 = vmatpush1.bf16.msra.mxu0 0
    %439 = vmatprep.subr.bf16.mxu0 0
    %440 = vmatpush1.bf16.msra.mxu0 0
    %441 = vmatprep.mubr.bf16.mxu0 0
    %442 = vmatmul.mubr.bf16.gmra.mrb[0].mxu0 %v407
    %v443 = vpop.f32.mrb[0].mxu0
    %v444 = vadd.f32 0.0, %v443
    %v445 = vpop.f32.mrb[0].mxu0
    %v446 = vpop.f32.mrb[0].mxu0
    %v447 = vpop.f32.mrb[0].mxu0
    %448 = vdwg.mxu0
    %v449 = vld [vmem:[%s5 + $0x10] sm:$0xf]
    %v450 = vld [vmem:[%s5 + $0x14] sm:$0xf]
    %v451 = vld [vmem:[%s5 + $0x18] sm:$0xf]
    %v452 = vld [vmem:[%s5 + $0x1c] sm:$0xf]
    %v457 = vunpack.c.l.b16 %v449
    %v458 = vunpack.c.l.b16 %v450
    %v459 = vunpack.c.l.b16 %v451
    %v460 = vunpack.c.l.b16 %v452
    %v461 = vpack.c.b16 %v458, %v457
    %v462 = vpack.c.b16 %v460, %v459
    %465 = vmatprep.subr.bf16.mxu0 0
    %466 = vmatpush1.bf16.msra.mxu0 %v461
    %467 = vmatprep.subr.bf16.mxu0 0
    %468 = vmatpush1.bf16.msra.mxu0 %v462
    %469 = vmatprep.subr.bf16.mxu0 0
    %470 = vmatpush1.bf16.msra.mxu0 0
    %471 = vmatprep.subr.bf16.mxu0 0
    %472 = vmatpush1.bf16.msra.mxu0 0
    %473 = vmatprep.subr.bf16.mxu0 0
    %474 = vmatpush1.bf16.msra.mxu0 0
    %475 = vmatprep.subr.bf16.mxu0 0
    %476 = vmatpush1.bf16.msra.mxu0 0
    %477 = vmatprep.subr.bf16.mxu0 0
    %478 = vmatpush1.bf16.msra.mxu0 0
    %479 = vmatprep.subr.bf16.mxu0 0
    %480 = vmatpush1.bf16.msra.mxu0 0
    %481 = vmatprep.subr.bf16.mxu0 0
    %482 = vmatpush1.bf16.msra.mxu0 0
    %483 = vmatprep.subr.bf16.mxu0 0
    %484 = vmatpush1.bf16.msra.mxu0 0
    %485 = vmatprep.subr.bf16.mxu0 0
    %486 = vmatpush1.bf16.msra.mxu0 0
    %487 = vmatprep.subr.bf16.mxu0 0
    %488 = vmatpush1.bf16.msra.mxu0 0
    %489 = vmatprep.subr.bf16.mxu0 0
    %490 = vmatpush1.bf16.msra.mxu0 0
    %491 = vmatprep.subr.bf16.mxu0 0
    %492 = vmatpush1.bf16.msra.mxu0 0
    %493 = vmatprep.subr.bf16.mxu0 0
    %494 = vmatpush1.bf16.msra.mxu0 0
    %495 = vmatprep.subr.bf16.mxu0 0
    %496 = vmatpush1.bf16.msra.mxu0 0
    %497 = vmatprep.mubr.bf16.mxu0 0
    %498 = vmatmul.mubr.bf16.gmra.mrb[0].mxu0 %v407
    %v499 = vpop.f32.mrb[0].mxu0
    %v500 = vadd.f32 0.0, %v499
    %v501 = vpop.f32.mrb[0].mxu0
    %v502 = vpop.f32.mrb[0].mxu0
    %v503 = vpop.f32.mrb[0].mxu0
    %504 = vdwg.mxu0
    %v505 = vld [vmem:[%s5 + $0x20] sm:$0xf]
    %v506 = vld [vmem:[%s5 + $0x24] sm:$0xf]
    %v507 = vld [vmem:[%s5 + $0x28] sm:$0xf]
    %v508 = vld [vmem:[%s5 + $0x2c] sm:$0xf]
    %v513 = vunpack.c.l.b16 %v505
    %v514 = vunpack.c.l.b16 %v506
    %v515 = vunpack.c.l.b16 %v507
    %v516 = vunpack.c.l.b16 %v508
    %v517 = vpack.c.b16 %v514, %v513
    %v518 = vpack.c.b16 %v516, %v515
    %521 = vmatprep.subr.bf16.mxu0 0
    %522 = vmatpush1.bf16.msra.mxu0 %v517
    %523 = vmatprep.subr.bf16.mxu0 0
    %524 = vmatpush1.bf16.msra.mxu0 %v518
    %525 = vmatprep.subr.bf16.mxu0 0
    %526 = vmatpush1.bf16.msra.mxu0 0
    %527 = vmatprep.subr.bf16.mxu0 0
    %528 = vmatpush1.bf16.msra.mxu0 0
    %529 = vmatprep.subr.bf16.mxu0 0
    %530 = vmatpush1.bf16.msra.mxu0 0
    %531 = vmatprep.subr.bf16.mxu0 0
    %532 = vmatpush1.bf16.msra.mxu0 0
    %533 = vmatprep.subr.bf16.mxu0 0
    %534 = vmatpush1.bf16.msra.mxu0 0
    %535 = vmatprep.subr.bf16.mxu0 0
    %536 = vmatpush1.bf16.msra.mxu0 0
    %537 = vmatprep.subr.bf16.mxu0 0
    %538 = vmatpush1.bf16.msra.mxu0 0
    %539 = vmatprep.subr.bf16.mxu0 0
    %540 = vmatpush1.bf16.msra.mxu0 0
    %541 = vmatprep.subr.bf16.mxu0 0
    %542 = vmatpush1.bf16.msra.mxu0 0
    %543 = vmatprep.subr.bf16.mxu0 0
    %544 = vmatpush1.bf16.msra.mxu0 0
    %545 = vmatprep.subr.bf16.mxu0 0
    %546 = vmatpush1.bf16.msra.mxu0 0
    %547 = vmatprep.subr.bf16.mxu0 0
    %548 = vmatpush1.bf16.msra.mxu0 0
    %549 = vmatprep.subr.bf16.mxu0 0
    %550 = vmatpush1.bf16.msra.mxu0 0
    %551 = vmatprep.subr.bf16.mxu0 0
    %552 = vmatpush1.bf16.msra.mxu0 0
    %553 = vmatprep.mubr.bf16.mxu0 0
    %554 = vmatmul.mubr.bf16.gmra.mrb[0].mxu0 %v407
    %v555 = vpop.f32.mrb[0].mxu0
    %v556 = vadd.f32 0.0, %v555
    %v557 = vpop.f32.mrb[0].mxu0
    %v558 = vpop.f32.mrb[0].mxu0
    %v559 = vpop.f32.mrb[0].mxu0
    %560 = vdwg.mxu0
    %v562 = vrot.slane %v444, 7
    %v564 = vsel %vm369, 0.0, %v562
    %v565 = vadd.f32 %v564, %v500
    %v567 = vrot.slane %v556, 1
    %v569 = vsel %vm375, %v567, 0.0
    %v570 = vadd.f32 %v565, %v569
    %v571 = vld [vmem:[%s6] sm:$0x1]
    %v573 = vlaneseq
    %v574 = vshrl.u32 %v573, 7
    %v575 = vsub.s32 0, %v574
    %v576 = vrot.slane %v571, %v575
    %v578 = vadd.f32 %v570, %v576
    %v579 = vadd.f32 %v578, %v193
    %580 = vst.msk [vmem:[#allocation2 + $0x7] sm:$0x1] %vm48, 0.0
    %581 = vst.msk [vmem:[#allocation2 + $0x10] sm:$0x1] %vm48, 0.0
    %582 = vst.msk [vmem:[#allocation2 + $0x8] sm:$0xff] %vm51, %v579
    %v583 = vld [vmem:[%s54] ss:$2 sm:$0xf]
    %v584 = vld [vmem:[%s56] ss:$2 sm:$0xf]
    %v585 = vld [vmem:[%s58] ss:$2 sm:$0xf]
    %v586 = vld [vmem:[%s60] ss:$2 sm:$0xf]
    %588 = vrot.lane.b32.xlu0 %v584, 32
    %v589 = vpop.permute.xlu0 %588
    %592 = vrot.lane.b32.xlu0 %v585, 64
    %v593 = vpop.permute.xlu0 %592
    %596 = vrot.lane.b32.xlu0 %v586, 96
    %v597 = vpop.permute.xlu0 %596
    %v599 = vsel %vm51, %v583, %v589
    %v600 = vsel %vm75, %v599, %v593
    %v601 = vsel %vm77, %v600, %v597
    %v602 = vpack.c.bf16 %v601, %v601
    %v603 = vld [vmem:[%s7] sm:$0xf]
    %v604 = vld [vmem:[%s7 + $0x4] sm:$0xf]
    %v605 = vld [vmem:[%s7 + $0x8] sm:$0xf]
    %v606 = vld [vmem:[%s7 + $0xc] sm:$0xf]
    %v607 = vld [vmem:[%s7 + $0x10] sm:$0xf]
    %v608 = vld [vmem:[%s7 + $0x14] sm:$0xf]
    %v609 = vld [vmem:[%s7 + $0x18] sm:$0xf]
    %v610 = vld [vmem:[%s7 + $0x1c] sm:$0xf]
    %v611 = vld [vmem:[%s7 + $0x20] sm:$0xf]
    %v612 = vld [vmem:[%s7 + $0x24] sm:$0xf]
    %v613 = vld [vmem:[%s7 + $0x28] sm:$0xf]
    %v614 = vld [vmem:[%s7 + $0x2c] sm:$0xf]
    %v615 = vld [vmem:[%s7 + $0x30] sm:$0xf]
    %v616 = vld [vmem:[%s7 + $0x34] sm:$0xf]
    %v617 = vld [vmem:[%s7 + $0x38] sm:$0xf]
    %v618 = vld [vmem:[%s7 + $0x3c] sm:$0xf]
    %v619 = vld [vmem:[%s8] sm:$0x1]
    %v621 = vlaneseq
    %v622 = vshrl.u32 %v621, 7
    %v623 = vsub.s32 0, %v622
    %v624 = vrot.slane %v619, %v623
    %v642 = vunpack.c.l.b16 %v603
    %v643 = vunpack.c.l.b16 %v604
    %v644 = vunpack.c.l.b16 %v605
    %v645 = vunpack.c.l.b16 %v606
    %v646 = vunpack.c.l.b16 %v607
    %v647 = vunpack.c.l.b16 %v608
    %v648 = vunpack.c.l.b16 %v609
    %v649 = vunpack.c.l.b16 %v610
    %v650 = vunpack.c.l.b16 %v611
    %v651 = vunpack.c.l.b16 %v612
    %v652 = vunpack.c.l.b16 %v613
    %v653 = vunpack.c.l.b16 %v614
    %v654 = vunpack.c.l.b16 %v615
    %v655 = vunpack.c.l.b16 %v616
    %v656 = vunpack.c.l.b16 %v617
    %v657 = vunpack.c.l.b16 %v618
    %v658 = vpack.c.b16 %v643, %v642
    %v659 = vpack.c.b16 %v645, %v644
    %v660 = vpack.c.b16 %v647, %v646
    %v661 = vpack.c.b16 %v649, %v648
    %v662 = vpack.c.b16 %v651, %v650
    %v663 = vpack.c.b16 %v653, %v652
    %v664 = vpack.c.b16 %v655, %v654
    %v665 = vpack.c.b16 %v657, %v656
    %674 = vmatprep.subr.bf16.mxu0 0
    %675 = vmatpush1.bf16.msra.mxu0 %v658
    %676 = vmatprep.subr.bf16.mxu0 0
    %677 = vmatpush1.bf16.msra.mxu0 %v659
    %678 = vmatprep.subr.bf16.mxu0 0
    %679 = vmatpush1.bf16.msra.mxu0 %v660
    %680 = vmatprep.subr.bf16.mxu0 0
    %681 = vmatpush1.bf16.msra.mxu0 %v661
    %682 = vmatprep.subr.bf16.mxu0 0
    %683 = vmatpush1.bf16.msra.mxu0 %v662
    %684 = vmatprep.subr.bf16.mxu0 0
    %685 = vmatpush1.bf16.msra.mxu0 %v663
    %686 = vmatprep.subr.bf16.mxu0 0
    %687 = vmatpush1.bf16.msra.mxu0 %v664
    %688 = vmatprep.subr.bf16.mxu0 0
    %689 = vmatpush1.bf16.msra.mxu0 %v665
    %690 = vmatprep.subr.bf16.mxu0 0
    %691 = vmatpush1.bf16.msra.mxu0 0
    %692 = vmatprep.subr.bf16.mxu0 0
    %693 = vmatpush1.bf16.msra.mxu0 0
    %694 = vmatprep.subr.bf16.mxu0 0
    %695 = vmatpush1.bf16.msra.mxu0 0
    %696 = vmatprep.subr.bf16.mxu0 0
    %697 = vmatpush1.bf16.msra.mxu0 0
    %698 = vmatprep.subr.bf16.mxu0 0
    %699 = vmatpush1.bf16.msra.mxu0 0
    %700 = vmatprep.subr.bf16.mxu0 0
    %701 = vmatpush1.bf16.msra.mxu0 0
    %702 = vmatprep.subr.bf16.mxu0 0
    %703 = vmatpush1.bf16.msra.mxu0 0
    %704 = vmatprep.subr.bf16.mxu0 0
    %705 = vmatpush1.bf16.msra.mxu0 0
    %706 = vmatprep.mubr.bf16.mxu0 0
    %707 = vmatmul.mubr.bf16.gmra.mrb[0].mxu0 %v602
    %v708 = vpop.f32.mrb[0].mxu0
    %v709 = vadd.f32 %v624, %v708
    %v710 = vpop.f32.mrb[0].mxu0
    %v711 = vpop.f32.mrb[0].mxu0
    %v712 = vpop.f32.mrb[0].mxu0
    %713 = vdwg.mxu0
    %vm714 = vcmp.ge.f32.partialorder %v709, 0.0
    %v715 = vmul.f32 %v709, 0.2
    %v716 = vsel %vm714, %v709, %v715
    %v717 = vpack.c.bf16 %v716, %v716
    %v718 = vld [vmem:[%s9] sm:$0xf]
    %v719 = vld [vmem:[%s9 + $0x4] sm:$0xf]
    %v720 = vld [vmem:[%s9 + $0x8] sm:$0xf]
    %v721 = vld [vmem:[%s9 + $0xc] sm:$0xf]
    %v726 = vunpack.c.l.b16 %v718
    %v727 = vunpack.c.l.b16 %v719
    %v728 = vunpack.c.l.b16 %v720
    %v729 = vunpack.c.l.b16 %v721
    %v730 = vpack.c.b16 %v727, %v726
    %v731 = vpack.c.b16 %v729, %v728
    %v735 = vsel %vm51, %v717, 0
    %737 = vmatprep.subr.bf16.mxu0 0
    %738 = vmatpush1.bf16.msra.mxu0 %v730
    %739 = vmatprep.subr.bf16.mxu0 0
    %740 = vmatpush1.bf16.msra.mxu0 %v731
    %741 = vmatprep.subr.bf16.mxu0 0
    %742 = vmatpush1.bf16.msra.mxu0 0
    %743 = vmatprep.subr.bf16.mxu0 0
    %744 = vmatpush1.bf16.msra.mxu0 0
    %745 = vmatprep.subr.bf16.mxu0 0
    %746 = vmatpush1.bf16.msra.mxu0 0
    %747 = vmatprep.subr.bf16.mxu0 0
    %748 = vmatpush1.bf16.msra.mxu0 0
    %749 = vmatprep.subr.bf16.mxu0 0
    %750 = vmatpush1.bf16.msra.mxu0 0
    %751 = vmatprep.subr.bf16.mxu0 0
    %752 = vmatpush1.bf16.msra.mxu0 0
    %753 = vmatprep.subr.bf16.mxu0 0
    %754 = vmatpush1.bf16.msra.mxu0 0
    %755 = vmatprep.subr.bf16.mxu0 0
    %756 = vmatpush1.bf16.msra.mxu0 0
    %757 = vmatprep.subr.bf16.mxu0 0
    %758 = vmatpush1.bf16.msra.mxu0 0
    %759 = vmatprep.subr.bf16.mxu0 0
    %760 = vmatpush1.bf16.msra.mxu0 0
    %761 = vmatprep.subr.bf16.mxu0 0
    %762 = vmatpush1.bf16.msra.mxu0 0
    %763 = vmatprep.subr.bf16.mxu0 0
    %764 = vmatpush1.bf16.msra.mxu0 0
    %765 = vmatprep.subr.bf16.mxu0 0
    %766 = vmatpush1.bf16.msra.mxu0 0
    %767 = vmatprep.subr.bf16.mxu0 0
    %768 = vmatpush1.bf16.msra.mxu0 0
    %769 = vmatprep.mubr.bf16.mxu0 0
    %770 = vmatmul.mubr.bf16.gmra.mrb[0].mxu0 %v735
    %v771 = vpop.f32.mrb[0].mxu0
    %v772 = vadd.f32 0.0, %v771
    %v773 = vpop.f32.mrb[0].mxu0
    %v774 = vpop.f32.mrb[0].mxu0
    %v775 = vpop.f32.mrb[0].mxu0
    %776 = vdwg.mxu0
    %v777 = vld [vmem:[%s9 + $0x10] sm:$0xf]
    %v778 = vld [vmem:[%s9 + $0x14] sm:$0xf]
    %v779 = vld [vmem:[%s9 + $0x18] sm:$0xf]
    %v780 = vld [vmem:[%s9 + $0x1c] sm:$0xf]
    %v785 = vunpack.c.l.b16 %v777
    %v786 = vunpack.c.l.b16 %v778
    %v787 = vunpack.c.l.b16 %v779
    %v788 = vunpack.c.l.b16 %v780
    %v789 = vpack.c.b16 %v786, %v785
    %v790 = vpack.c.b16 %v788, %v787
    %793 = vmatprep.subr.bf16.mxu0 0
    %794 = vmatpush1.bf16.msra.mxu0 %v789
    %795 = vmatprep.subr.bf16.mxu0 0
    %796 = vmatpush1.bf16.msra.mxu0 %v790
    %797 = vmatprep.subr.bf16.mxu0 0
    %798 = vmatpush1.bf16.msra.mxu0 0
    %799 = vmatprep.subr.bf16.mxu0 0
    %800 = vmatpush1.bf16.msra.mxu0 0
    %801 = vmatprep.subr.bf16.mxu0 0
    %802 = vmatpush1.bf16.msra.mxu0 0
    %803 = vmatprep.subr.bf16.mxu0 0
    %804 = vmatpush1.bf16.msra.mxu0 0
    %805 = vmatprep.subr.bf16.mxu0 0
    %806 = vmatpush1.bf16.msra.mxu0 0
    %807 = vmatprep.subr.bf16.mxu0 0
    %808 = vmatpush1.bf16.msra.mxu0 0
    %809 = vmatprep.subr.bf16.mxu0 0
    %810 = vmatpush1.bf16.msra.mxu0 0
    %811 = vmatprep.subr.bf16.mxu0 0
    %812 = vmatpush1.bf16.msra.mxu0 0
    %813 = vmatprep.subr.bf16.mxu0 0
    %814 = vmatpush1.bf16.msra.mxu0 0
    %815 = vmatprep.subr.bf16.mxu0 0
    %816 = vmatpush1.bf16.msra.mxu0 0
    %817 = vmatprep.subr.bf16.mxu0 0
    %818 = vmatpush1.bf16.msra.mxu0 0
    %819 = vmatprep.subr.bf16.mxu0 0
    %820 = vmatpush1.bf16.msra.mxu0 0
    %821 = vmatprep.subr.bf16.mxu0 0
    %822 = vmatpush1.bf16.msra.mxu0 0
    %823 = vmatprep.subr.bf16.mxu0 0
    %824 = vmatpush1.bf16.msra.mxu0 0
    %825 = vmatprep.mubr.bf16.mxu0 0
    %826 = vmatmul.mubr.bf16.gmra.mrb[0].mxu0 %v735
    %v827 = vpop.f32.mrb[0].mxu0
    %v828 = vadd.f32 0.0, %v827
    %v829 = vpop.f32.mrb[0].mxu0
    %v830 = vpop.f32.mrb[0].mxu0
    %v831 = vpop.f32.mrb[0].mxu0
    %832 = vdwg.mxu0
    %v833 = vld [vmem:[%s9 + $0x20] sm:$0xf]
    %v834 = vld [vmem:[%s9 + $0x24] sm:$0xf]
    %v835 = vld [vmem:[%s9 + $0x28] sm:$0xf]
    %v836 = vld [vmem:[%s9 + $0x2c] sm:$0xf]
    %v841 = vunpack.c.l.b16 %v833
    %v842 = vunpack.c.l.b16 %v834
    %v843 = vunpack.c.l.b16 %v835
    %v844 = vunpack.c.l.b16 %v836
    %v845 = vpack.c.b16 %v842, %v841
    %v846 = vpack.c.b16 %v844, %v843
    %849 = vmatprep.subr.bf16.mxu0 0
    %850 = vmatpush1.bf16.msra.mxu0 %v845
    %851 = vmatprep.subr.bf16.mxu0 0
    %852 = vmatpush1.bf16.msra.mxu0 %v846
    %853 = vmatprep.subr.bf16.mxu0 0
    %854 = vmatpush1.bf16.msra.mxu0 0
    %855 = vmatprep.subr.bf16.mxu0 0
    %856 = vmatpush1.bf16.msra.mxu0 0
    %857 = vmatprep.subr.bf16.mxu0 0
    %858 = vmatpush1.bf16.msra.mxu0 0
    %859 = vmatprep.subr.bf16.mxu0 0
    %860 = vmatpush1.bf16.msra.mxu0 0
    %861 = vmatprep.subr.bf16.mxu0 0
    %862 = vmatpush1.bf16.msra.mxu0 0
    %863 = vmatprep.subr.bf16.mxu0 0
    %864 = vmatpush1.bf16.msra.mxu0 0
    %865 = vmatprep.subr.bf16.mxu0 0
    %866 = vmatpush1.bf16.msra.mxu0 0
    %867 = vmatprep.subr.bf16.mxu0 0
    %868 = vmatpush1.bf16.msra.mxu0 0
    %869 = vmatprep.subr.bf16.mxu0 0
    %870 = vmatpush1.bf16.msra.mxu0 0
    %871 = vmatprep.subr.bf16.mxu0 0
    %872 = vmatpush1.bf16.msra.mxu0 0
    %873 = vmatprep.subr.bf16.mxu0 0
    %874 = vmatpush1.bf16.msra.mxu0 0
    %875 = vmatprep.subr.bf16.mxu0 0
    %876 = vmatpush1.bf16.msra.mxu0 0
    %877 = vmatprep.subr.bf16.mxu0 0
    %878 = vmatpush1.bf16.msra.mxu0 0
    %879 = vmatprep.subr.bf16.mxu0 0
    %880 = vmatpush1.bf16.msra.mxu0 0
    %881 = vmatprep.mubr.bf16.mxu0 0
    %882 = vmatmul.mubr.bf16.gmra.mrb[0].mxu0 %v735
    %v883 = vpop.f32.mrb[0].mxu0
    %v884 = vadd.f32 0.0, %v883
    %v885 = vpop.f32.mrb[0].mxu0
    %v886 = vpop.f32.mrb[0].mxu0
    %v887 = vpop.f32.mrb[0].mxu0
    %888 = vdwg.mxu0
    %v890 = vrot.slane %v772, 7
    %v892 = vsel %vm369, 0.0, %v890
    %v893 = vadd.f32 %v892, %v828
    %v895 = vrot.slane %v884, 1
    %vm897 = vcmask 1042432
    %v898 = vsel %vm897, %v895, 0.0
    %v899 = vadd.f32 %v893, %v898
    %v900 = vld [vmem:[%s10] sm:$0x1]
    %v902 = vlaneseq
    %v903 = vshrl.u32 %v902, 7
    %v904 = vsub.s32 0, %v903
    %v905 = vrot.slane %v900, %v904
    %v907 = vadd.f32 %v899, %v905
    %vm908 = vcmp.ge.f32.partialorder %v907, 0.0
    %v909 = vmul.f32 %v907, 0.2
    %v910 = vsel %vm908, %v907, %v909
    %v911 = vpack.c.bf16 %v910, %v910
    %v912 = vld [vmem:[%s11] sm:$0xf]
    %v913 = vld [vmem:[%s11 + $0x4] sm:$0xf]
    %v914 = vld [vmem:[%s11 + $0x8] sm:$0xf]
    %v915 = vld [vmem:[%s11 + $0xc] sm:$0xf]
    %v920 = vunpack.c.l.b16 %v912
    %v921 = vunpack.c.l.b16 %v913
    %v922 = vunpack.c.l.b16 %v914
    %v923 = vunpack.c.l.b16 %v915
    %v924 = vpack.c.b16 %v921, %v920
    %v925 = vpack.c.b16 %v923, %v922
    %v929 = vsel %vm51, %v911, 0
    %931 = vmatprep.subr.bf16.mxu0 0
    %932 = vmatpush1.bf16.msra.mxu0 %v924
    %933 = vmatprep.subr.bf16.mxu0 0
    %934 = vmatpush1.bf16.msra.mxu0 %v925
    %935 = vmatprep.subr.bf16.mxu0 0
    %936 = vmatpush1.bf16.msra.mxu0 0
    %937 = vmatprep.subr.bf16.mxu0 0
    %938 = vmatpush1.bf16.msra.mxu0 0
    %939 = vmatprep.subr.bf16.mxu0 0
    %940 = vmatpush1.bf16.msra.mxu0 0
    %941 = vmatprep.subr.bf16.mxu0 0
    %942 = vmatpush1.bf16.msra.mxu0 0
    %943 = vmatprep.subr.bf16.mxu0 0
    %944 = vmatpush1.bf16.msra.mxu0 0
    %945 = vmatprep.subr.bf16.mxu0 0
    %946 = vmatpush1.bf16.msra.mxu0 0
    %947 = vmatprep.subr.bf16.mxu0 0
    %948 = vmatpush1.bf16.msra.mxu0 0
    %949 = vmatprep.subr.bf16.mxu0 0
    %950 = vmatpush1.bf16.msra.mxu0 0
    %951 = vmatprep.subr.bf16.mxu0 0
    %952 = vmatpush1.bf16.msra.mxu0 0
    %953 = vmatprep.subr.bf16.mxu0 0
    %954 = vmatpush1.bf16.msra.mxu0 0
    %955 = vmatprep.subr.bf16.mxu0 0
    %956 = vmatpush1.bf16.msra.mxu0 0
    %957 = vmatprep.subr.bf16.mxu0 0
    %958 = vmatpush1.bf16.msra.mxu0 0
    %959 = vmatprep.subr.bf16.mxu0 0
    %960 = vmatpush1.bf16.msra.mxu0 0
    %961 = vmatprep.subr.bf16.mxu0 0
    %962 = vmatpush1.bf16.msra.mxu0 0
    %963 = vmatprep.mubr.bf16.mxu0 0
    %964 = vmatmul.mubr.bf16.gmra.mrb[0].mxu0 %v929
    %v965 = vpop.f32.mrb[0].mxu0
    %v966 = vadd.f32 0.0, %v965
    %v967 = vpop.f32.mrb[0].mxu0
    %v968 = vpop.f32.mrb[0].mxu0
    %v969 = vpop.f32.mrb[0].mxu0
    %970 = vdwg.mxu0
    %v971 = vld [vmem:[%s11 + $0x10] sm:$0xf]
    %v972 = vld [vmem:[%s11 + $0x14] sm:$0xf]
    %v973 = vld [vmem:[%s11 + $0x18] sm:$0xf]
    %v974 = vld [vmem:[%s11 + $0x1c] sm:$0xf]
    %v979 = vunpack.c.l.b16 %v971
    %v980 = vunpack.c.l.b16 %v972
    %v981 = vunpack.c.l.b16 %v973
    %v982 = vunpack.c.l.b16 %v974
    %v983 = vpack.c.b16 %v980, %v979
    %v984 = vpack.c.b16 %v982, %v981
    %987 = vmatprep.subr.bf16.mxu0 0
    %988 = vmatpush1.bf16.msra.mxu0 %v983
    %989 = vmatprep.subr.bf16.mxu0 0
    %990 = vmatpush1.bf16.msra.mxu0 %v984
    %991 = vmatprep.subr.bf16.mxu0 0
    %992 = vmatpush1.bf16.msra.mxu0 0
    %993 = vmatprep.subr.bf16.mxu0 0
    %994 = vmatpush1.bf16.msra.mxu0 0
    %995 = vmatprep.subr.bf16.mxu0 0
    %996 = vmatpush1.bf16.msra.mxu0 0
    %997 = vmatprep.subr.bf16.mxu0 0
    %998 = vmatpush1.bf16.msra.mxu0 0
    %999 = vmatprep.subr.bf16.mxu0 0
    %1000 = vmatpush1.bf16.msra.mxu0 0
    %1001 = vmatprep.subr.bf16.mxu0 0
    %1002 = vmatpush1.bf16.msra.mxu0 0
    %1003 = vmatprep.subr.bf16.mxu0 0
    %1004 = vmatpush1.bf16.msra.mxu0 0
    %1005 = vmatprep.subr.bf16.mxu0 0
    %1006 = vmatpush1.bf16.msra.mxu0 0
    %1007 = vmatprep.subr.bf16.mxu0 0
    %1008 = vmatpush1.bf16.msra.mxu0 0
    %1009 = vmatprep.subr.bf16.mxu0 0
    %1010 = vmatpush1.bf16.msra.mxu0 0
    %1011 = vmatprep.subr.bf16.mxu0 0
    %1012 = vmatpush1.bf16.msra.mxu0 0
    %1013 = vmatprep.subr.bf16.mxu0 0
    %1014 = vmatpush1.bf16.msra.mxu0 0
    %1015 = vmatprep.subr.bf16.mxu0 0
    %1016 = vmatpush1.bf16.msra.mxu0 0
    %1017 = vmatprep.subr.bf16.mxu0 0
    %1018 = vmatpush1.bf16.msra.mxu0 0
    %1019 = vmatprep.mubr.bf16.mxu0 0
    %1020 = vmatmul.mubr.bf16.gmra.mrb[0].mxu0 %v929
    %v1021 = vpop.f32.mrb[0].mxu0
    %v1022 = vadd.f32 0.0, %v1021
    %v1023 = vpop.f32.mrb[0].mxu0
    %v1024 = vpop.f32.mrb[0].mxu0
    %v1025 = vpop.f32.mrb[0].mxu0
    %1026 = vdwg.mxu0
    %v1027 = vld [vmem:[%s11 + $0x20] sm:$0xf]
    %v1028 = vld [vmem:[%s11 + $0x24] sm:$0xf]
    %v1029 = vld [vmem:[%s11 + $0x28] sm:$0xf]
    %v1030 = vld [vmem:[%s11 + $0x2c] sm:$0xf]
    %v1035 = vunpack.c.l.b16 %v1027
    %v1036 = vunpack.c.l.b16 %v1028
    %v1037 = vunpack.c.l.b16 %v1029
    %v1038 = vunpack.c.l.b16 %v1030
    %v1039 = vpack.c.b16 %v1036, %v1035
    %v1040 = vpack.c.b16 %v1038, %v1037
    %1043 = vmatprep.subr.bf16.mxu0 0
    %1044 = vmatpush1.bf16.msra.mxu0 %v1039
    %1045 = vmatprep.subr.bf16.mxu0 0
    %1046 = vmatpush1.bf16.msra.mxu0 %v1040
    %1047 = vmatprep.subr.bf16.mxu0 0
    %1048 = vmatpush1.bf16.msra.mxu0 0
    %1049 = vmatprep.subr.bf16.mxu0 0
    %1050 = vmatpush1.bf16.msra.mxu0 0
    %1051 = vmatprep.subr.bf16.mxu0 0
    %1052 = vmatpush1.bf16.msra.mxu0 0
    %1053 = vmatprep.subr.bf16.mxu0 0
    %1054 = vmatpush1.bf16.msra.mxu0 0
    %1055 = vmatprep.subr.bf16.mxu0 0
    %1056 = vmatpush1.bf16.msra.mxu0 0
    %1057 = vmatprep.subr.bf16.mxu0 0
    %1058 = vmatpush1.bf16.msra.mxu0 0
    %1059 = vmatprep.subr.bf16.mxu0 0
    %1060 = vmatpush1.bf16.msra.mxu0 0
    %1061 = vmatprep.subr.bf16.mxu0 0
    %1062 = vmatpush1.bf16.msra.mxu0 0
    %1063 = vmatprep.subr.bf16.mxu0 0
    %1064 = vmatpush1.bf16.msra.mxu0 0
    %1065 = vmatprep.subr.bf16.mxu0 0
    %1066 = vmatpush1.bf16.msra.mxu0 0
    %1067 = vmatprep.subr.bf16.mxu0 0
    %1068 = vmatpush1.bf16.msra.mxu0 0
    %1069 = vmatprep.subr.bf16.mxu0 0
    %1070 = vmatpush1.bf16.msra.mxu0 0
    %1071 = vmatprep.subr.bf16.mxu0 0
    %1072 = vmatpush1.bf16.msra.mxu0 0
    %1073 = vmatprep.subr.bf16.mxu0 0
    %1074 = vmatpush1.bf16.msra.mxu0 0
    %1075 = vmatprep.mubr.bf16.mxu0 0
    %1076 = vmatmul.mubr.bf16.gmra.mrb[0].mxu0 %v929
    %v1077 = vpop.f32.mrb[0].mxu0
    %v1078 = vadd.f32 0.0, %v1077
    %v1079 = vpop.f32.mrb[0].mxu0
    %v1080 = vpop.f32.mrb[0].mxu0
    %v1081 = vpop.f32.mrb[0].mxu0
    %1082 = vdwg.mxu0
    %v1084 = vrot.slane %v966, 7
    %v1086 = vsel %vm369, 0.0, %v1084
    %v1087 = vadd.f32 %v1086, %v1022
    %v1089 = vrot.slane %v1078, 1
    %v1091 = vsel %vm897, %v1089, 0.0
    %v1092 = vadd.f32 %v1087, %v1091
    %v1093 = vld [vmem:[%s12] sm:$0x1]
    %v1095 = vlaneseq
    %v1096 = vshrl.u32 %v1095, 7
    %v1097 = vsub.s32 0, %v1096
    %v1098 = vrot.slane %v1093, %v1097
    %v1100 = vadd.f32 %v1092, %v1098
    %v1101 = vadd.f32 %v1100, %v716
    %vm1102 = vcmask 257024
    %1103 = vst.msk [vmem:[#allocation3] sm:$0xf] %vm1102, %v1101
    %s1104 = scalar_lea.vmem %s0, 16
    %v1105 = vld [vmem:[%s1104] sm:$0xff]
    %v1106 = vld [vmem:[%s1104 + $0x8] sm:$0xff]
    %1107 = vst.msk [vmem:[#allocation2 + $0x7] sm:$0x1] %vm48, 0.0
    %1108 = vst.msk [vmem:[#allocation2 + $0x18] sm:$0x1] %vm48, 0.0
    %1109 = vst.msk [vmem:[#allocation2 + $0x8] sm:$0xff] %vm51, %v1105
    %1110 = vst.msk [vmem:[#allocation2 + $0x10] sm:$0xff] %vm51, %v1106
    %v1111 = vld [vmem:[%s54] ss:$2 sm:$0xff]
    %v1112 = vld [vmem:[%s56] ss:$2 sm:$0xff]
    %v1113 = vld [vmem:[%s58] ss:$2 sm:$0xff]
    %v1114 = vld [vmem:[%s60] ss:$2 sm:$0xff]
    %1116 = vrot.lane.b32.xlu0 %v1112, 32
    %v1117 = vpop.permute.xlu0 %1116
    %1120 = vrot.lane.b32.xlu0 %v1113, 64
    %v1121 = vpop.permute.xlu0 %1120
    %1124 = vrot.lane.b32.xlu0 %v1114, 96
    %v1125 = vpop.permute.xlu0 %1124
    %v1127 = vsel %vm51, %v1111, %v1117
    %v1128 = vsel %vm75, %v1127, %v1121
    %v1129 = vsel %vm77, %v1128, %v1125
    %v1130 = vpack.c.bf16 %v1129, %v1129
    %v1131 = vld [vmem:[%s1] sm:$0xf]
    %v1132 = vld [vmem:[%s1 + $0x4] sm:$0xf]
    %v1133 = vld [vmem:[%s1 + $0x8] sm:$0xf]
    %v1134 = vld [vmem:[%s1 + $0xc] sm:$0xf]
    %v1135 = vld [vmem:[%s1 + $0x10] sm:$0xf]
    %v1136 = vld [vmem:[%s1 + $0x14] sm:$0xf]
    %v1137 = vld [vmem:[%s1 + $0x18] sm:$0xf]
    %v1138 = vld [vmem:[%s1 + $0x1c] sm:$0xf]
    %v1139 = vld [vmem:[%s1 + $0x20] sm:$0xf]
    %v1140 = vld [vmem:[%s1 + $0x24] sm:$0xf]
    %v1141 = vld [vmem:[%s1 + $0x28] sm:$0xf]
    %v1142 = vld [vmem:[%s1 + $0x2c] sm:$0xf]
    %v1143 = vld [vmem:[%s1 + $0x30] sm:$0xf]
    %v1144 = vld [vmem:[%s1 + $0x34] sm:$0xf]
    %v1145 = vld [vmem:[%s1 + $0x38] sm:$0xf]
    %v1146 = vld [vmem:[%s1 + $0x3c] sm:$0xf]
    %v1147 = vld [vmem:[%s2] sm:$0x1]
    %v1149 = vlaneseq
    %v1150 = vshrl.u32 %v1149, 7
    %v1151 = vsub.s32 0, %v1150
    %v1152 = vrot.slane %v1147, %v1151
    %v1170 = vunpack.c.l.b16 %v1131
    %v1171 = vunpack.c.l.b16 %v1132
    %v1172 = vunpack.c.l.b16 %v1133
    %v1173 = vunpack.c.l.b16 %v1134
    %v1174 = vunpack.c.l.b16 %v1135
    %v1175 = vunpack.c.l.b16 %v1136
    %v1176 = vunpack.c.l.b16 %v1137
    %v1177 = vunpack.c.l.b16 %v1138
    %v1178 = vunpack.c.l.b16 %v1139
    %v1179 = vunpack.c.l.b16 %v1140
    %v1180 = vunpack.c.l.b16 %v1141
    %v1181 = vunpack.c.l.b16 %v1142
    %v1182 = vunpack.c.l.b16 %v1143
    %v1183 = vunpack.c.l.b16 %v1144
    %v1184 = vunpack.c.l.b16 %v1145
    %v1185 = vunpack.c.l.b16 %v1146
    %v1186 = vpack.c.b16 %v1171, %v1170
    %v1187 = vpack.c.b16 %v1173, %v1172
    %v1188 = vpack.c.b16 %v1175, %v1174
    %v1189 = vpack.c.b16 %v1177, %v1176
    %v1190 = vpack.c.b16 %v1179, %v1178
    %v1191 = vpack.c.b16 %v1181, %v1180
    %v1192 = vpack.c.b16 %v1183, %v1182
    %v1193 = vpack.c.b16 %v1185, %v1184
    %1202 = vmatprep.subr.bf16.mxu0 0
    %1203 = vmatpush1.bf16.msra.mxu0 %v1186
    %1204 = vmatprep.subr.bf16.mxu0 0
    %1205 = vmatpush1.bf16.msra.mxu0 %v1187
    %1206 = vmatprep.subr.bf16.mxu0 0
    %1207 = vmatpush1.bf16.msra.mxu0 %v1188
    %1208 = vmatprep.subr.bf16.mxu0 0
    %1209 = vmatpush1.bf16.msra.mxu0 %v1189
    %1210 = vmatprep.subr.bf16.mxu0 0
    %1211 = vmatpush1.bf16.msra.mxu0 %v1190
    %1212 = vmatprep.subr.bf16.mxu0 0
    %1213 = vmatpush1.bf16.msra.mxu0 %v1191
    %1214 = vmatprep.subr.bf16.mxu0 0
    %1215 = vmatpush1.bf16.msra.mxu0 %v1192
    %1216 = vmatprep.subr.bf16.mxu0 0
    %1217 = vmatpush1.bf16.msra.mxu0 %v1193
    %1218 = vmatprep.subr.bf16.mxu0 0
    %1219 = vmatpush1.bf16.msra.mxu0 0
    %1220 = vmatprep.subr.bf16.mxu0 0
    %1221 = vmatpush1.bf16.msra.mxu0 0
    %1222 = vmatprep.subr.bf16.mxu0 0
    %1223 = vmatpush1.bf16.msra.mxu0 0
    %1224 = vmatprep.subr.bf16.mxu0 0
    %1225 = vmatpush1.bf16.msra.mxu0 0
    %1226 = vmatprep.subr.bf16.mxu0 0
    %1227 = vmatpush1.bf16.msra.mxu0 0
    %1228 = vmatprep.subr.bf16.mxu0 0
    %1229 = vmatpush1.bf16.msra.mxu0 0
    %1230 = vmatprep.subr.bf16.mxu0 0
    %1231 = vmatpush1.bf16.msra.mxu0 0
    %1232 = vmatprep.subr.bf16.mxu0 0
    %1233 = vmatpush1.bf16.msra.mxu0 0
    %1234 = vmatprep.mubr.bf16.mxu0 0
    %1235 = vmatmul.mubr.bf16.gmra.mrb[0].mxu0 %v1130
    %v1236 = vpop.f32.mrb[0].mxu0
    %v1237 = vadd.f32 %v1152, %v1236
    %v1238 = vpop.f32.mrb[0].mxu0
    %v1239 = vpop.f32.mrb[0].mxu0
    %v1240 = vpop.f32.mrb[0].mxu0
    %1241 = vdwg.mxu0
    %vm1242 = vcmp.ge.f32.partialorder %v1237, 0.0
    %v1243 = vmul.f32 %v1237, 0.2
    %v1244 = vsel %vm1242, %v1237, %v1243
    %v1245 = vpack.c.bf16 %v1244, %v1244
    %v1246 = vld [vmem:[%s3] sm:$0xf]
    %v1247 = vld [vmem:[%s3 + $0x4] sm:$0xf]
    %v1248 = vld [vmem:[%s3 + $0x8] sm:$0xf]
    %v1249 = vld [vmem:[%s3 + $0xc] sm:$0xf]
    %v1254 = vunpack.c.l.b16 %v1246
    %v1255 = vunpack.c.l.b16 %v1247
    %v1256 = vunpack.c.l.b16 %v1248
    %v1257 = vunpack.c.l.b16 %v1249
    %v1258 = vpack.c.b16 %v1255, %v1254
    %v1259 = vpack.c.b16 %v1257, %v1256
    %v1263 = vsel %vm51, %v1245, 0
    %1265 = vmatprep.subr.bf16.mxu0 0
    %1266 = vmatpush1.bf16.msra.mxu0 %v1258
    %1267 = vmatprep.subr.bf16.mxu0 0
    %1268 = vmatpush1.bf16.msra.mxu0 %v1259
    %1269 = vmatprep.subr.bf16.mxu0 0
    %1270 = vmatpush1.bf16.msra.mxu0 0
    %1271 = vmatprep.subr.bf16.mxu0 0
    %1272 = vmatpush1.bf16.msra.mxu0 0
    %1273 = vmatprep.subr.bf16.mxu0 0
    %1274 = vmatpush1.bf16.msra.mxu0 0
    %1275 = vmatprep.subr.bf16.mxu0 0
    %1276 = vmatpush1.bf16.msra.mxu0 0
    %1277 = vmatprep.subr.bf16.mxu0 0
    %1278 = vmatpush1.bf16.msra.mxu0 0
    %1279 = vmatprep.subr.bf16.mxu0 0
    %1280 = vmatpush1.bf16.msra.mxu0 0
    %1281 = vmatprep.subr.bf16.mxu0 0
    %1282 = vmatpush1.bf16.msra.mxu0 0
    %1283 = vmatprep.subr.bf16.mxu0 0
    %1284 = vmatpush1.bf16.msra.mxu0 0
    %1285 = vmatprep.subr.bf16.mxu0 0
    %1286 = vmatpush1.bf16.msra.mxu0 0
    %1287 = vmatprep.subr.bf16.mxu0 0
    %1288 = vmatpush1.bf16.msra.mxu0 0
    %1289 = vmatprep.subr.bf16.mxu0 0
    %1290 = vmatpush1.bf16.msra.mxu0 0
    %1291 = vmatprep.subr.bf16.mxu0 0
    %1292 = vmatpush1.bf16.msra.mxu0 0
    %1293 = vmatprep.subr.bf16.mxu0 0
    %1294 = vmatpush1.bf16.msra.mxu0 0
    %1295 = vmatprep.subr.bf16.mxu0 0
    %1296 = vmatpush1.bf16.msra.mxu0 0
    %1297 = vmatprep.mubr.bf16.mxu0 0
    %1298 = vmatmul.mubr.bf16.gmra.mrb[0].mxu0 %v1263
    %v1299 = vpop.f32.mrb[0].mxu0
    %v1300 = vadd.f32 0.0, %v1299
    %v1301 = vpop.f32.mrb[0].mxu0
    %v1302 = vpop.f32.mrb[0].mxu0
    %v1303 = vpop.f32.mrb[0].mxu0
    %1304 = vdwg.mxu0
    %v1305 = vld [vmem:[%s3 + $0x10] sm:$0xf]
    %v1306 = vld [vmem:[%s3 + $0x14] sm:$0xf]
    %v1307 = vld [vmem:[%s3 + $0x18] sm:$0xf]
    %v1308 = vld [vmem:[%s3 + $0x1c] sm:$0xf]
    %v1313 = vunpack.c.l.b16 %v1305
    %v1314 = vunpack.c.l.b16 %v1306
    %v1315 = vunpack.c.l.b16 %v1307
    %v1316 = vunpack.c.l.b16 %v1308
    %v1317 = vpack.c.b16 %v1314, %v1313
    %v1318 = vpack.c.b16 %v1316, %v1315
    %1321 = vmatprep.subr.bf16.mxu0 0
    %1322 = vmatpush1.bf16.msra.mxu0 %v1317
    %1323 = vmatprep.subr.bf16.mxu0 0
    %1324 = vmatpush1.bf16.msra.mxu0 %v1318
    %1325 = vmatprep.subr.bf16.mxu0 0
    %1326 = vmatpush1.bf16.msra.mxu0 0
    %1327 = vmatprep.subr.bf16.mxu0 0
    %1328 = vmatpush1.bf16.msra.mxu0 0
    %1329 = vmatprep.subr.bf16.mxu0 0
    %1330 = vmatpush1.bf16.msra.mxu0 0
    %1331 = vmatprep.subr.bf16.mxu0 0
    %1332 = vmatpush1.bf16.msra.mxu0 0
    %1333 = vmatprep.subr.bf16.mxu0 0
    %1334 = vmatpush1.bf16.msra.mxu0 0
    %1335 = vmatprep.subr.bf16.mxu0 0
    %1336 = vmatpush1.bf16.msra.mxu0 0
    %1337 = vmatprep.subr.bf16.mxu0 0
    %1338 = vmatpush1.bf16.msra.mxu0 0
    %1339 = vmatprep.subr.bf16.mxu0 0
    %1340 = vmatpush1.bf16.msra.mxu0 0
    %1341 = vmatprep.subr.bf16.mxu0 0
    %1342 = vmatpush1.bf16.msra.mxu0 0
    %1343 = vmatprep.subr.bf16.mxu0 0
    %1344 = vmatpush1.bf16.msra.mxu0 0
    %1345 = vmatprep.subr.bf16.mxu0 0
    %1346 = vmatpush1.bf16.msra.mxu0 0
    %1347 = vmatprep.subr.bf16.mxu0 0
    %1348 = vmatpush1.bf16.msra.mxu0 0
    %1349 = vmatprep.subr.bf16.mxu0 0
    %1350 = vmatpush1.bf16.msra.mxu0 0
    %1351 = vmatprep.subr.bf16.mxu0 0
    %1352 = vmatpush1.bf16.msra.mxu0 0
    %1353 = vmatprep.mubr.bf16.mxu0 0
    %1354 = vmatmul.mubr.bf16.gmra.mrb[0].mxu0 %v1263
    %v1355 = vpop.f32.mrb[0].mxu0
    %v1356 = vadd.f32 0.0, %v1355
    %v1357 = vpop.f32.mrb[0].mxu0
    %v1358 = vpop.f32.mrb[0].mxu0
    %v1359 = vpop.f32.mrb[0].mxu0
    %1360 = vdwg.mxu0
    %v1361 = vld [vmem:[%s3 + $0x20] sm:$0xf]
    %v1362 = vld [vmem:[%s3 + $0x24] sm:$0xf]
    %v1363 = vld [vmem:[%s3 + $0x28] sm:$0xf]
    %v1364 = vld [vmem:[%s3 + $0x2c] sm:$0xf]
    %v1369 = vunpack.c.l.b16 %v1361
    %v1370 = vunpack.c.l.b16 %v1362
    %v1371 = vunpack.c.l.b16 %v1363
    %v1372 = vunpack.c.l.b16 %v1364
    %v1373 = vpack.c.b16 %v1370, %v1369
    %v1374 = vpack.c.b16 %v1372, %v1371
    %1377 = vmatprep.subr.bf16.mxu0 0
    %1378 = vmatpush1.bf16.msra.mxu0 %v1373
    %1379 = vmatprep.subr.bf16.mxu0 0
    %1380 = vmatpush1.bf16.msra.mxu0 %v1374
    %1381 = vmatprep.subr.bf16.mxu0 0
    %1382 = vmatpush1.bf16.msra.mxu0 0
    %1383 = vmatprep.subr.bf16.mxu0 0
    %1384 = vmatpush1.bf16.msra.mxu0 0
    %1385 = vmatprep.subr.bf16.mxu0 0
    %1386 = vmatpush1.bf16.msra.mxu0 0
    %1387 = vmatprep.subr.bf16.mxu0 0
    %1388 = vmatpush1.bf16.msra.mxu0 0
    %1389 = vmatprep.subr.bf16.mxu0 0
    %1390 = vmatpush1.bf16.msra.mxu0 0
    %1391 = vmatprep.subr.bf16.mxu0 0
    %1392 = vmatpush1.bf16.msra.mxu0 0
    %1393 = vmatprep.subr.bf16.mxu0 0
    %1394 = vmatpush1.bf16.msra.mxu0 0
    %1395 = vmatprep.subr.bf16.mxu0 0
    %1396 = vmatpush1.bf16.msra.mxu0 0
    %1397 = vmatprep.subr.bf16.mxu0 0
    %1398 = vmatpush1.bf16.msra.mxu0 0
    %1399 = vmatprep.subr.bf16.mxu0 0
    %1400 = vmatpush1.bf16.msra.mxu0 0
    %1401 = vmatprep.subr.bf16.mxu0 0
    %1402 = vmatpush1.bf16.msra.mxu0 0
    %1403 = vmatprep.subr.bf16.mxu0 0
    %1404 = vmatpush1.bf16.msra.mxu0 0
    %1405 = vmatprep.subr.bf16.mxu0 0
    %1406 = vmatpush1.bf16.msra.mxu0 0
    %1407 = vmatprep.subr.bf16.mxu0 0
    %1408 = vmatpush1.bf16.msra.mxu0 0
    %1409 = vmatprep.mubr.bf16.mxu0 0
    %1410 = vmatmul.mubr.bf16.gmra.mrb[0].mxu0 %v1263
    %v1411 = vpop.f32.mrb[0].mxu0
    %v1412 = vadd.f32 0.0, %v1411
    %v1413 = vpop.f32.mrb[0].mxu0
    %v1414 = vpop.f32.mrb[0].mxu0
    %v1415 = vpop.f32.mrb[0].mxu0
    %1416 = vdwg.mxu0
    %v1418 = vrot.slane %v1300, 7
    %v1420 = vsel %vm369, 0.0, %v1418
    %v1421 = vadd.f32 %v1420, %v1356
    %v1423 = vrot.slane %v1412, 1
    %v1425 = vsel %vm375, %v1423, 0.0
    %v1426 = vadd.f32 %v1421, %v1425
    %v1427 = vld [vmem:[%s4] sm:$0x1]
    %v1429 = vlaneseq
    %v1430 = vshrl.u32 %v1429, 7
    %v1431 = vsub.s32 0, %v1430
    %v1432 = vrot.slane %v1427, %v1431
    %v1434 = vadd.f32 %v1426, %v1432
    %vm1435 = vcmp.ge.f32.partialorder %v1434, 0.0
    %v1436 = vmul.f32 %v1434, 0.2
    %v1437 = vsel %vm1435, %v1434, %v1436
    %v1438 = vpack.c.bf16 %v1437, %v1437
    %v1439 = vld [vmem:[%s5] sm:$0xf]
    %v1440 = vld [vmem:[%s5 + $0x4] sm:$0xf]
    %v1441 = vld [vmem:[%s5 + $0x8] sm:$0xf]
    %v1442 = vld [vmem:[%s5 + $0xc] sm:$0xf]
    %v1447 = vunpack.c.l.b16 %v1439
    %v1448 = vunpack.c.l.b16 %v1440
    %v1449 = vunpack.c.l.b16 %v1441
    %v1450 = vunpack.c.l.b16 %v1442
    %v1451 = vpack.c.b16 %v1448, %v1447
    %v1452 = vpack.c.b16 %v1450, %v1449
    %v1456 = vsel %vm51, %v1438, 0
    %1458 = vmatprep.subr.bf16.mxu0 0
    %1459 = vmatpush1.bf16.msra.mxu0 %v1451
    %1460 = vmatprep.subr.bf16.mxu0 0
    %1461 = vmatpush1.bf16.msra.mxu0 %v1452
    %1462 = vmatprep.subr.bf16.mxu0 0
    %1463 = vmatpush1.bf16.msra.mxu0 0
    %1464 = vmatprep.subr.bf16.mxu0 0
    %1465 = vmatpush1.bf16.msra.mxu0 0
    %1466 = vmatprep.subr.bf16.mxu0 0
    %1467 = vmatpush1.bf16.msra.mxu0 0
    %1468 = vmatprep.subr.bf16.mxu0 0
    %1469 = vmatpush1.bf16.msra.mxu0 0
    %1470 = vmatprep.subr.bf16.mxu0 0
    %1471 = vmatpush1.bf16.msra.mxu0 0
    %1472 = vmatprep.subr.bf16.mxu0 0
    %1473 = vmatpush1.bf16.msra.mxu0 0
    %1474 = vmatprep.subr.bf16.mxu0 0
    %1475 = vmatpush1.bf16.msra.mxu0 0
    %1476 = vmatprep.subr.bf16.mxu0 0
    %1477 = vmatpush1.bf16.msra.mxu0 0
    %1478 = vmatprep.subr.bf16.mxu0 0
    %1479 = vmatpush1.bf16.msra.mxu0 0
    %1480 = vmatprep.subr.bf16.mxu0 0
    %1481 = vmatpush1.bf16.msra.mxu0 0
    %1482 = vmatprep.subr.bf16.mxu0 0
    %1483 = vmatpush1.bf16.msra.mxu0 0
    %1484 = vmatprep.subr.bf16.mxu0 0
    %1485 = vmatpush1.bf16.msra.mxu0 0
    %1486 = vmatprep.subr.bf16.mxu0 0
    %1487 = vmatpush1.bf16.msra.mxu0 0
    %1488 = vmatprep.subr.bf16.mxu0 0
    %1489 = vmatpush1.bf16.msra.mxu0 0
    %1490 = vmatprep.mubr.bf16.mxu0 0
    %1491 = vmatmul.mubr.bf16.gmra.mrb[0].mxu0 %v1456
    %v1492 = vpop.f32.mrb[0].mxu0
    %v1493 = vadd.f32 0.0, %v1492
    %v1494 = vpop.f32.mrb[0].mxu0
    %v1495 = vpop.f32.mrb[0].mxu0
    %v1496 = vpop.f32.mrb[0].mxu0
    %1497 = vdwg.mxu0
    %v1498 = vld [vmem:[%s5 + $0x10] sm:$0xf]
    %v1499 = vld [vmem:[%s5 + $0x14] sm:$0xf]
    %v1500 = vld [vmem:[%s5 + $0x18] sm:$0xf]
    %v1501 = vld [vmem:[%s5 + $0x1c] sm:$0xf]
    %v1506 = vunpack.c.l.b16 %v1498
    %v1507 = vunpack.c.l.b16 %v1499
    %v1508 = vunpack.c.l.b16 %v1500
    %v1509 = vunpack.c.l.b16 %v1501
    %v1510 = vpack.c.b16 %v1507, %v1506
    %v1511 = vpack.c.b16 %v1509, %v1508
    %1514 = vmatprep.subr.bf16.mxu0 0
    %1515 = vmatpush1.bf16.msra.mxu0 %v1510
    %1516 = vmatprep.subr.bf16.mxu0 0
    %1517 = vmatpush1.bf16.msra.mxu0 %v1511
    %1518 = vmatprep.subr.bf16.mxu0 0
    %1519 = vmatpush1.bf16.msra.mxu0 0
    %1520 = vmatprep.subr.bf16.mxu0 0
    %1521 = vmatpush1.bf16.msra.mxu0 0
    %1522 = vmatprep.subr.bf16.mxu0 0
    %1523 = vmatpush1.bf16.msra.mxu0 0
    %1524 = vmatprep.subr.bf16.mxu0 0
    %1525 = vmatpush1.bf16.msra.mxu0 0
    %1526 = vmatprep.subr.bf16.mxu0 0
    %1527 = vmatpush1.bf16.msra.mxu0 0
    %1528 = vmatprep.subr.bf16.mxu0 0
    %1529 = vmatpush1.bf16.msra.mxu0 0
    %1530 = vmatprep.subr.bf16.mxu0 0
    %1531 = vmatpush1.bf16.msra.mxu0 0
    %1532 = vmatprep.subr.bf16.mxu0 0
    %1533 = vmatpush1.bf16.msra.mxu0 0
    %1534 = vmatprep.subr.bf16.mxu0 0
    %1535 = vmatpush1.bf16.msra.mxu0 0
    %1536 = vmatprep.subr.bf16.mxu0 0
    %1537 = vmatpush1.bf16.msra.mxu0 0
    %1538 = vmatprep.subr.bf16.mxu0 0
    %1539 = vmatpush1.bf16.msra.mxu0 0
    %1540 = vmatprep.subr.bf16.mxu0 0
    %1541 = vmatpush1.bf16.msra.mxu0 0
    %1542 = vmatprep.subr.bf16.mxu0 0
    %1543 = vmatpush1.bf16.msra.mxu0 0
    %1544 = vmatprep.subr.bf16.mxu0 0
    %1545 = vmatpush1.bf16.msra.mxu0 0
    %1546 = vmatprep.mubr.bf16.mxu0 0
    %1547 = vmatmul.mubr.bf16.gmra.mrb[0].mxu0 %v1456
    %v1548 = vpop.f32.mrb[0].mxu0
    %v1549 = vadd.f32 0.0, %v1548
    %v1550 = vpop.f32.mrb[0].mxu0
    %v1551 = vpop.f32.mrb[0].mxu0
    %v1552 = vpop.f32.mrb[0].mxu0
    %1553 = vdwg.mxu0
    %v1554 = vld [vmem:[%s5 + $0x20] sm:$0xf]
    %v1555 = vld [vmem:[%s5 + $0x24] sm:$0xf]
    %v1556 = vld [vmem:[%s5 + $0x28] sm:$0xf]
    %v1557 = vld [vmem:[%s5 + $0x2c] sm:$0xf]
    %v1562 = vunpack.c.l.b16 %v1554
    %v1563 = vunpack.c.l.b16 %v1555
    %v1564 = vunpack.c.l.b16 %v1556
    %v1565 = vunpack.c.l.b16 %v1557
    %v1566 = vpack.c.b16 %v1563, %v1562
    %v1567 = vpack.c.b16 %v1565, %v1564
    %1570 = vmatprep.subr.bf16.mxu0 0
    %1571 = vmatpush1.bf16.msra.mxu0 %v1566
    %1572 = vmatprep.subr.bf16.mxu0 0
    %1573 = vmatpush1.bf16.msra.mxu0 %v1567
    %1574 = vmatprep.subr.bf16.mxu0 0
    %1575 = vmatpush1.bf16.msra.mxu0 0
    %1576 = vmatprep.subr.bf16.mxu0 0
    %1577 = vmatpush1.bf16.msra.mxu0 0
    %1578 = vmatprep.subr.bf16.mxu0 0
    %1579 = vmatpush1.bf16.msra.mxu0 0
    %1580 = vmatprep.subr.bf16.mxu0 0
    %1581 = vmatpush1.bf16.msra.mxu0 0
    %1582 = vmatprep.subr.bf16.mxu0 0
    %1583 = vmatpush1.bf16.msra.mxu0 0
    %1584 = vmatprep.subr.bf16.mxu0 0
    %1585 = vmatpush1.bf16.msra.mxu0 0
    %1586 = vmatprep.subr.bf16.mxu0 0
    %1587 = vmatpush1.bf16.msra.mxu0 0
    %1588 = vmatprep.subr.bf16.mxu0 0
    %1589 = vmatpush1.bf16.msra.mxu0 0
    %1590 = vmatprep.subr.bf16.mxu0 0
    %1591 = vmatpush1.bf16.msra.mxu0 0
    %1592 = vmatprep.subr.bf16.mxu0 0
    %1593 = vmatpush1.bf16.msra.mxu0 0
    %1594 = vmatprep.subr.bf16.mxu0 0
    %1595 = vmatpush1.bf16.msra.mxu0 0
    %1596 = vmatprep.subr.bf16.mxu0 0
    %1597 = vmatpush1.bf16.msra.mxu0 0
    %1598 = vmatprep.subr.bf16.mxu0 0
    %1599 = vmatpush1.bf16.msra.mxu0 0
    %1600 = vmatprep.subr.bf16.mxu0 0
    %1601 = vmatpush1.bf16.msra.mxu0 0
    %1602 = vmatprep.mubr.bf16.mxu0 0
    %1603 = vmatmul.mubr.bf16.gmra.mrb[0].mxu0 %v1456
    %v1604 = vpop.f32.mrb[0].mxu0
    %v1605 = vadd.f32 0.0, %v1604
    %v1606 = vpop.f32.mrb[0].mxu0
    %v1607 = vpop.f32.mrb[0].mxu0
    %v1608 = vpop.f32.mrb[0].mxu0
    %1609 = vdwg.mxu0
    %v1611 = vrot.slane %v1493, 7
    %v1613 = vsel %vm369, 0.0, %v1611
    %v1614 = vadd.f32 %v1613, %v1549
    %v1616 = vrot.slane %v1605, 1
    %v1618 = vsel %vm375, %v1616, 0.0
    %v1619 = vadd.f32 %v1614, %v1618
    %v1620 = vld [vmem:[%s6] sm:$0x1]
    %v1622 = vlaneseq
    %v1623 = vshrl.u32 %v1622, 7
    %v1624 = vsub.s32 0, %v1623
    %v1625 = vrot.slane %v1620, %v1624
    %v1627 = vadd.f32 %v1619, %v1625
    %v1628 = vadd.f32 %v1627, %v1244
    %1629 = vst.msk [vmem:[#allocation2 + $0x7] sm:$0x1] %vm48, 0.0
    %1630 = vst.msk [vmem:[#allocation2 + $0x10] sm:$0x1] %vm48, 0.0
    %1631 = vst.msk [vmem:[#allocation2 + $0x8] sm:$0xff] %vm51, %v1628
    %v1632 = vld [vmem:[%s54] ss:$2 sm:$0xf]
    %v1633 = vld [vmem:[%s56] ss:$2 sm:$0xf]
    %v1634 = vld [vmem:[%s58] ss:$2 sm:$0xf]
    %v1635 = vld [vmem:[%s60] ss:$2 sm:$0xf]
    %1637 = vrot.lane.b32.xlu0 %v1633, 32
    %v1638 = vpop.permute.xlu0 %1637
    %1641 = vrot.lane.b32.xlu0 %v1634, 64
    %v1642 = vpop.permute.xlu0 %1641
    %1645 = vrot.lane.b32.xlu0 %v1635, 96
    %v1646 = vpop.permute.xlu0 %1645
    %v1648 = vsel %vm51, %v1632, %v1638
    %v1649 = vsel %vm75, %v1648, %v1642
    %v1650 = vsel %vm77, %v1649, %v1646
    %v1651 = vpack.c.bf16 %v1650, %v1650
    %v1652 = vld [vmem:[%s7] sm:$0xf]
    %v1653 = vld [vmem:[%s7 + $0x4] sm:$0xf]
    %v1654 = vld [vmem:[%s7 + $0x8] sm:$0xf]
    %v1655 = vld [vmem:[%s7 + $0xc] sm:$0xf]
    %v1656 = vld [vmem:[%s7 + $0x10] sm:$0xf]
    %v1657 = vld [vmem:[%s7 + $0x14] sm:$0xf]
    %v1658 = vld [vmem:[%s7 + $0x18] sm:$0xf]
    %v1659 = vld [vmem:[%s7 + $0x1c] sm:$0xf]
    %v1660 = vld [vmem:[%s7 + $0x20] sm:$0xf]
    %v1661 = vld [vmem:[%s7 + $0x24] sm:$0xf]
    %v1662 = vld [vmem:[%s7 + $0x28] sm:$0xf]
    %v1663 = vld [vmem:[%s7 + $0x2c] sm:$0xf]
    %v1664 = vld [vmem:[%s7 + $0x30] sm:$0xf]
    %v1665 = vld [vmem:[%s7 + $0x34] sm:$0xf]
    %v1666 = vld [vmem:[%s7 + $0x38] sm:$0xf]
    %v1667 = vld [vmem:[%s7 + $0x3c] sm:$0xf]
    %v1668 = vld [vmem:[%s8] sm:$0x1]
    %v1670 = vlaneseq
    %v1671 = vshrl.u32 %v1670, 7
    %v1672 = vsub.s32 0, %v1671
    %v1673 = vrot.slane %v1668, %v1672
    %v1691 = vunpack.c.l.b16 %v1652
    %v1692 = vunpack.c.l.b16 %v1653
    %v1693 = vunpack.c.l.b16 %v1654
    %v1694 = vunpack.c.l.b16 %v1655
    %v1695 = vunpack.c.l.b16 %v1656
    %v1696 = vunpack.c.l.b16 %v1657
    %v1697 = vunpack.c.l.b16 %v1658
    %v1698 = vunpack.c.l.b16 %v1659
    %v1699 = vunpack.c.l.b16 %v1660
    %v1700 = vunpack.c.l.b16 %v1661
    %v1701 = vunpack.c.l.b16 %v1662
    %v1702 = vunpack.c.l.b16 %v1663
    %v1703 = vunpack.c.l.b16 %v1664
    %v1704 = vunpack.c.l.b16 %v1665
    %v1705 = vunpack.c.l.b16 %v1666
    %v1706 = vunpack.c.l.b16 %v1667
    %v1707 = vpack.c.b16 %v1692, %v1691
    %v1708 = vpack.c.b16 %v1694, %v1693
    %v1709 = vpack.c.b16 %v1696, %v1695
    %v1710 = vpack.c.b16 %v1698, %v1697
    %v1711 = vpack.c.b16 %v1700, %v1699
    %v1712 = vpack.c.b16 %v1702, %v1701
    %v1713 = vpack.c.b16 %v1704, %v1703
    %v1714 = vpack.c.b16 %v1706, %v1705
    %1723 = vmatprep.subr.bf16.mxu0 0
    %1724 = vmatpush1.bf16.msra.mxu0 %v1707
    %1725 = vmatprep.subr.bf16.mxu0 0
    %1726 = vmatpush1.bf16.msra.mxu0 %v1708
    %1727 = vmatprep.subr.bf16.mxu0 0
    %1728 = vmatpush1.bf16.msra.mxu0 %v1709
    %1729 = vmatprep.subr.bf16.mxu0 0
    %1730 = vmatpush1.bf16.msra.mxu0 %v1710
    %1731 = vmatprep.subr.bf16.mxu0 0
    %1732 = vmatpush1.bf16.msra.mxu0 %v1711
    %1733 = vmatprep.subr.bf16.mxu0 0
    %1734 = vmatpush1.bf16.msra.mxu0 %v1712
    %1735 = vmatprep.subr.bf16.mxu0 0
    %1736 = vmatpush1.bf16.msra.mxu0 %v1713
    %1737 = vmatprep.subr.bf16.mxu0 0
    %1738 = vmatpush1.bf16.msra.mxu0 %v1714
    %1739 = vmatprep.subr.bf16.mxu0 0
    %1740 = vmatpush1.bf16.msra.mxu0 0
    %1741 = vmatprep.subr.bf16.mxu0 0
    %1742 = vmatpush1.bf16.msra.mxu0 0
    %1743 = vmatprep.subr.bf16.mxu0 0
    %1744 = vmatpush1.bf16.msra.mxu0 0
    %1745 = vmatprep.subr.bf16.mxu0 0
    %1746 = vmatpush1.bf16.msra.mxu0 0
    %1747 = vmatprep.subr.bf16.mxu0 0
    %1748 = vmatpush1.bf16.msra.mxu0 0
    %1749 = vmatprep.subr.bf16.mxu0 0
    %1750 = vmatpush1.bf16.msra.mxu0 0
    %1751 = vmatprep.subr.bf16.mxu0 0
    %1752 = vmatpush1.bf16.msra.mxu0 0
    %1753 = vmatprep.subr.bf16.mxu0 0
    %1754 = vmatpush1.bf16.msra.mxu0 0
    %1755 = vmatprep.mubr.bf16.mxu0 0
    %1756 = vmatmul.mubr.bf16.gmra.mrb[0].mxu0 %v1651
    %v1757 = vpop.f32.mrb[0].mxu0
    %v1758 = vadd.f32 %v1673, %v1757
    %v1759 = vpop.f32.mrb[0].mxu0
    %v1760 = vpop.f32.mrb[0].mxu0
    %v1761 = vpop.f32.mrb[0].mxu0
    %1762 = vdwg.mxu0
    %vm1763 = vcmp.ge.f32.partialorder %v1758, 0.0
    %v1764 = vmul.f32 %v1758, 0.2
    %v1765 = vsel %vm1763, %v1758, %v1764
    %v1766 = vpack.c.bf16 %v1765, %v1765
    %v1767 = vld [vmem:[%s9] sm:$0xf]
    %v1768 = vld [vmem:[%s9 + $0x4] sm:$0xf]
    %v1769 = vld [vmem:[%s9 + $0x8] sm:$0xf]
    %v1770 = vld [vmem:[%s9 + $0xc] sm:$0xf]
    %v1775 = vunpack.c.l.b16 %v1767
    %v1776 = vunpack.c.l.b16 %v1768
    %v1777 = vunpack.c.l.b16 %v1769
    %v1778 = vunpack.c.l.b16 %v1770
    %v1779 = vpack.c.b16 %v1776, %v1775
    %v1780 = vpack.c.b16 %v1778, %v1777
    %v1784 = vsel %vm51, %v1766, 0
    %1786 = vmatprep.subr.bf16.mxu0 0
    %1787 = vmatpush1.bf16.msra.mxu0 %v1779
    %1788 = vmatprep.subr.bf16.mxu0 0
    %1789 = vmatpush1.bf16.msra.mxu0 %v1780
    %1790 = vmatprep.subr.bf16.mxu0 0
    %1791 = vmatpush1.bf16.msra.mxu0 0
    %1792 = vmatprep.subr.bf16.mxu0 0
    %1793 = vmatpush1.bf16.msra.mxu0 0
    %1794 = vmatprep.subr.bf16.mxu0 0
    %1795 = vmatpush1.bf16.msra.mxu0 0
    %1796 = vmatprep.subr.bf16.mxu0 0
    %1797 = vmatpush1.bf16.msra.mxu0 0
    %1798 = vmatprep.subr.bf16.mxu0 0
    %1799 = vmatpush1.bf16.msra.mxu0 0
    %1800 = vmatprep.subr.bf16.mxu0 0
    %1801 = vmatpush1.bf16.msra.mxu0 0
    %1802 = vmatprep.subr.bf16.mxu0 0
    %1803 = vmatpush1.bf16.msra.mxu0 0
    %1804 = vmatprep.subr.bf16.mxu0 0
    %1805 = vmatpush1.bf16.msra.mxu0 0
    %1806 = vmatprep.subr.bf16.mxu0 0
    %1807 = vmatpush1.bf16.msra.mxu0 0
    %1808 = vmatprep.subr.bf16.mxu0 0
    %1809 = vmatpush1.bf16.msra.mxu0 0
    %1810 = vmatprep.subr.bf16.mxu0 0
    %1811 = vmatpush1.bf16.msra.mxu0 0
    %1812 = vmatprep.subr.bf16.mxu0 0
    %1813 = vmatpush1.bf16.msra.mxu0 0
    %1814 = vmatprep.subr.bf16.mxu0 0
    %1815 = vmatpush1.bf16.msra.mxu0 0
    %1816 = vmatprep.subr.bf16.mxu0 0
    %1817 = vmatpush1.bf16.msra.mxu0 0
    %1818 = vmatprep.mubr.bf16.mxu0 0
    %1819 = vmatmul.mubr.bf16.gmra.mrb[0].mxu0 %v1784
    %v1820 = vpop.f32.mrb[0].mxu0
    %v1821 = vadd.f32 0.0, %v1820
    %v1822 = vpop.f32.mrb[0].mxu0
    %v1823 = vpop.f32.mrb[0].mxu0
    %v1824 = vpop.f32.mrb[0].mxu0
    %1825 = vdwg.mxu0
    %v1826 = vld [vmem:[%s9 + $0x10] sm:$0xf]
    %v1827 = vld [vmem:[%s9 + $0x14] sm:$0xf]
    %v1828 = vld [vmem:[%s9 + $0x18] sm:$0xf]
    %v1829 = vld [vmem:[%s9 + $0x1c] sm:$0xf]
    %v1834 = vunpack.c.l.b16 %v1826
    %v1835 = vunpack.c.l.b16 %v1827
    %v1836 = vunpack.c.l.b16 %v1828
    %v1837 = vunpack.c.l.b16 %v1829
    %v1838 = vpack.c.b16 %v1835, %v1834
    %v1839 = vpack.c.b16 %v1837, %v1836
    %1842 = vmatprep.subr.bf16.mxu0 0
    %1843 = vmatpush1.bf16.msra.mxu0 %v1838
    %1844 = vmatprep.subr.bf16.mxu0 0
    %1845 = vmatpush1.bf16.msra.mxu0 %v1839
    %1846 = vmatprep.subr.bf16.mxu0 0
    %1847 = vmatpush1.bf16.msra.mxu0 0
    %1848 = vmatprep.subr.bf16.mxu0 0
    %1849 = vmatpush1.bf16.msra.mxu0 0
    %1850 = vmatprep.subr.bf16.mxu0 0
    %1851 = vmatpush1.bf16.msra.mxu0 0
    %1852 = vmatprep.subr.bf16.mxu0 0
    %1853 = vmatpush1.bf16.msra.mxu0 0
    %1854 = vmatprep.subr.bf16.mxu0 0
    %1855 = vmatpush1.bf16.msra.mxu0 0
    %1856 = vmatprep.subr.bf16.mxu0 0
    %1857 = vmatpush1.bf16.msra.mxu0 0
    %1858 = vmatprep.subr.bf16.mxu0 0
    %1859 = vmatpush1.bf16.msra.mxu0 0
    %1860 = vmatprep.subr.bf16.mxu0 0
    %1861 = vmatpush1.bf16.msra.mxu0 0
    %1862 = vmatprep.subr.bf16.mxu0 0
    %1863 = vmatpush1.bf16.msra.mxu0 0
    %1864 = vmatprep.subr.bf16.mxu0 0
    %1865 = vmatpush1.bf16.msra.mxu0 0
    %1866 = vmatprep.subr.bf16.mxu0 0
    %1867 = vmatpush1.bf16.msra.mxu0 0
    %1868 = vmatprep.subr.bf16.mxu0 0
    %1869 = vmatpush1.bf16.msra.mxu0 0
    %1870 = vmatprep.subr.bf16.mxu0 0
    %1871 = vmatpush1.bf16.msra.mxu0 0
    %1872 = vmatprep.subr.bf16.mxu0 0
    %1873 = vmatpush1.bf16.msra.mxu0 0
    %1874 = vmatprep.mubr.bf16.mxu0 0
    %1875 = vmatmul.mubr.bf16.gmra.mrb[0].mxu0 %v1784
    %v1876 = vpop.f32.mrb[0].mxu0
    %v1877 = vadd.f32 0.0, %v1876
    %v1878 = vpop.f32.mrb[0].mxu0
    %v1879 = vpop.f32.mrb[0].mxu0
    %v1880 = vpop.f32.mrb[0].mxu0
    %1881 = vdwg.mxu0
    %v1882 = vld [vmem:[%s9 + $0x20] sm:$0xf]
    %v1883 = vld [vmem:[%s9 + $0x24] sm:$0xf]
    %v1884 = vld [vmem:[%s9 + $0x28] sm:$0xf]
    %v1885 = vld [vmem:[%s9 + $0x2c] sm:$0xf]
    %v1890 = vunpack.c.l.b16 %v1882
    %v1891 = vunpack.c.l.b16 %v1883
    %v1892 = vunpack.c.l.b16 %v1884
    %v1893 = vunpack.c.l.b16 %v1885
    %v1894 = vpack.c.b16 %v1891, %v1890
    %v1895 = vpack.c.b16 %v1893, %v1892
    %1898 = vmatprep.subr.bf16.mxu0 0
    %1899 = vmatpush1.bf16.msra.mxu0 %v1894
    %1900 = vmatprep.subr.bf16.mxu0 0
    %1901 = vmatpush1.bf16.msra.mxu0 %v1895
    %1902 = vmatprep.subr.bf16.mxu0 0
    %1903 = vmatpush1.bf16.msra.mxu0 0
    %1904 = vmatprep.subr.bf16.mxu0 0
    %1905 = vmatpush1.bf16.msra.mxu0 0
    %1906 = vmatprep.subr.bf16.mxu0 0
    %1907 = vmatpush1.bf16.msra.mxu0 0
    %1908 = vmatprep.subr.bf16.mxu0 0
    %1909 = vmatpush1.bf16.msra.mxu0 0
    %1910 = vmatprep.subr.bf16.mxu0 0
    %1911 = vmatpush1.bf16.msra.mxu0 0
    %1912 = vmatprep.subr.bf16.mxu0 0
    %1913 = vmatpush1.bf16.msra.mxu0 0
    %1914 = vmatprep.subr.bf16.mxu0 0
    %1915 = vmatpush1.bf16.msra.mxu0 0
    %1916 = vmatprep.subr.bf16.mxu0 0
    %1917 = vmatpush1.bf16.msra.mxu0 0
    %1918 = vmatprep.subr.bf16.mxu0 0
    %1919 = vmatpush1.bf16.msra.mxu0 0
    %1920 = vmatprep.subr.bf16.mxu0 0
    %1921 = vmatpush1.bf16.msra.mxu0 0
    %1922 = vmatprep.subr.bf16.mxu0 0
    %1923 = vmatpush1.bf16.msra.mxu0 0
    %1924 = vmatprep.subr.bf16.mxu0 0
    %1925 = vmatpush1.bf16.msra.mxu0 0
    %1926 = vmatprep.subr.bf16.mxu0 0
    %1927 = vmatpush1.bf16.msra.mxu0 0
    %1928 = vmatprep.subr.bf16.mxu0 0
    %1929 = vmatpush1.bf16.msra.mxu0 0
    %1930 = vmatprep.mubr.bf16.mxu0 0
    %1931 = vmatmul.mubr.bf16.gmra.mrb[0].mxu0 %v1784
    %v1932 = vpop.f32.mrb[0].mxu0
    %v1933 = vadd.f32 0.0, %v1932
    %v1934 = vpop.f32.mrb[0].mxu0
    %v1935 = vpop.f32.mrb[0].mxu0
    %v1936 = vpop.f32.mrb[0].mxu0
    %1937 = vdwg.mxu0
    %v1939 = vrot.slane %v1821, 7
    %v1941 = vsel %vm369, 0.0, %v1939
    %v1942 = vadd.f32 %v1941, %v1877
    %v1944 = vrot.slane %v1933, 1
    %v1946 = vsel %vm897, %v1944, 0.0
    %v1947 = vadd.f32 %v1942, %v1946
    %v1948 = vld [vmem:[%s10] sm:$0x1]
    %v1950 = vlaneseq
    %v1951 = vshrl.u32 %v1950, 7
    %v1952 = vsub.s32 0, %v1951
    %v1953 = vrot.slane %v1948, %v1952
    %v1955 = vadd.f32 %v1947, %v1953
    %vm1956 = vcmp.ge.f32.partialorder %v1955, 0.0
    %v1957 = vmul.f32 %v1955, 0.2
    %v1958 = vsel %vm1956, %v1955, %v1957
    %v1959 = vpack.c.bf16 %v1958, %v1958
    %v1960 = vld [vmem:[%s11] sm:$0xf]
    %v1961 = vld [vmem:[%s11 + $0x4] sm:$0xf]
    %v1962 = vld [vmem:[%s11 + $0x8] sm:$0xf]
    %v1963 = vld [vmem:[%s11 + $0xc] sm:$0xf]
    %v1968 = vunpack.c.l.b16 %v1960
    %v1969 = vunpack.c.l.b16 %v1961
    %v1970 = vunpack.c.l.b16 %v1962
    %v1971 = vunpack.c.l.b16 %v1963
    %v1972 = vpack.c.b16 %v1969, %v1968
    %v1973 = vpack.c.b16 %v1971, %v1970
    %v1977 = vsel %vm51, %v1959, 0
    %1979 = vmatprep.subr.bf16.mxu0 0
    %1980 = vmatpush1.bf16.msra.mxu0 %v1972
    %1981 = vmatprep.subr.bf16.mxu0 0
    %1982 = vmatpush1.bf16.msra.mxu0 %v1973
    %1983 = vmatprep.subr.bf16.mxu0 0
    %1984 = vmatpush1.bf16.msra.mxu0 0
    %1985 = vmatprep.subr.bf16.mxu0 0
    %1986 = vmatpush1.bf16.msra.mxu0 0
    %1987 = vmatprep.subr.bf16.mxu0 0
    %1988 = vmatpush1.bf16.msra.mxu0 0
    %1989 = vmatprep.subr.bf16.mxu0 0
    %1990 = vmatpush1.bf16.msra.mxu0 0
    %1991 = vmatprep.subr.bf16.mxu0 0
    %1992 = vmatpush1.bf16.msra.mxu0 0
    %1993 = vmatprep.subr.bf16.mxu0 0
    %1994 = vmatpush1.bf16.msra.mxu0 0
    %1995 = vmatprep.subr.bf16.mxu0 0
    %1996 = vmatpush1.bf16.msra.mxu0 0
    %1997 = vmatprep.subr.bf16.mxu0 0
    %1998 = vmatpush1.bf16.msra.mxu0 0
    %1999 = vmatprep.subr.bf16.mxu0 0
    %2000 = vmatpush1.bf16.msra.mxu0 0
    %2001 = vmatprep.subr.bf16.mxu0 0
    %2002 = vmatpush1.bf16.msra.mxu0 0
    %2003 = vmatprep.subr.bf16.mxu0 0
    %2004 = vmatpush1.bf16.msra.mxu0 0
    %2005 = vmatprep.subr.bf16.mxu0 0
    %2006 = vmatpush1.bf16.msra.mxu0 0
    %2007 = vmatprep.subr.bf16.mxu0 0
    %2008 = vmatpush1.bf16.msra.mxu0 0
    %2009 = vmatprep.subr.bf16.mxu0 0
    %2010 = vmatpush1.bf16.msra.mxu0 0
    %2011 = vmatprep.mubr.bf16.mxu0 0
    %2012 = vmatmul.mubr.bf16.gmra.mrb[0].mxu0 %v1977
    %v2013 = vpop.f32.mrb[0].mxu0
    %v2014 = vadd.f32 0.0, %v2013
    %v2015 = vpop.f32.mrb[0].mxu0
    %v2016 = vpop.f32.mrb[0].mxu0
    %v2017 = vpop.f32.mrb[0].mxu0
    %2018 = vdwg.mxu0
    %v2019 = vld [vmem:[%s11 + $0x10] sm:$0xf]
    %v2020 = vld [vmem:[%s11 + $0x14] sm:$0xf]
    %v2021 = vld [vmem:[%s11 + $0x18] sm:$0xf]
    %v2022 = vld [vmem:[%s11 + $0x1c] sm:$0xf]
    %v2027 = vunpack.c.l.b16 %v2019
    %v2028 = vunpack.c.l.b16 %v2020
    %v2029 = vunpack.c.l.b16 %v2021
    %v2030 = vunpack.c.l.b16 %v2022
    %v2031 = vpack.c.b16 %v2028, %v2027
    %v2032 = vpack.c.b16 %v2030, %v2029
    %2035 = vmatprep.subr.bf16.mxu0 0
    %2036 = vmatpush1.bf16.msra.mxu0 %v2031
    %2037 = vmatprep.subr.bf16.mxu0 0
    %2038 = vmatpush1.bf16.msra.mxu0 %v2032
    %2039 = vmatprep.subr.bf16.mxu0 0
    %2040 = vmatpush1.bf16.msra.mxu0 0
    %2041 = vmatprep.subr.bf16.mxu0 0
    %2042 = vmatpush1.bf16.msra.mxu0 0
    %2043 = vmatprep.subr.bf16.mxu0 0
    %2044 = vmatpush1.bf16.msra.mxu0 0
    %2045 = vmatprep.subr.bf16.mxu0 0
    %2046 = vmatpush1.bf16.msra.mxu0 0
    %2047 = vmatprep.subr.bf16.mxu0 0
    %2048 = vmatpush1.bf16.msra.mxu0 0
    %2049 = vmatprep.subr.bf16.mxu0 0
    %2050 = vmatpush1.bf16.msra.mxu0 0
    %2051 = vmatprep.subr.bf16.mxu0 0
    %2052 = vmatpush1.bf16.msra.mxu0 0
    %2053 = vmatprep.subr.bf16.mxu0 0
    %2054 = vmatpush1.bf16.msra.mxu0 0
    %2055 = vmatprep.subr.bf16.mxu0 0
    %2056 = vmatpush1.bf16.msra.mxu0 0
    %2057 = vmatprep.subr.bf16.mxu0 0
    %2058 = vmatpush1.bf16.msra.mxu0 0
    %2059 = vmatprep.subr.bf16.mxu0 0
    %2060 = vmatpush1.bf16.msra.mxu0 0
    %2061 = vmatprep.subr.bf16.mxu0 0
    %2062 = vmatpush1.bf16.msra.mxu0 0
    %2063 = vmatprep.subr.bf16.mxu0 0
    %2064 = vmatpush1.bf16.msra.mxu0 0
    %2065 = vmatprep.subr.bf16.mxu0 0
    %2066 = vmatpush1.bf16.msra.mxu0 0
    %2067 = vmatprep.mubr.bf16.mxu0 0
    %2068 = vmatmul.mubr.bf16.gmra.mrb[0].mxu0 %v1977
    %v2069 = vpop.f32.mrb[0].mxu0
    %v2070 = vadd.f32 0.0, %v2069
    %v2071 = vpop.f32.mrb[0].mxu0
    %v2072 = vpop.f32.mrb[0].mxu0
    %v2073 = vpop.f32.mrb[0].mxu0
    %2074 = vdwg.mxu0
    %v2075 = vld [vmem:[%s11 + $0x20] sm:$0xf]
    %v2076 = vld [vmem:[%s11 + $0x24] sm:$0xf]
    %v2077 = vld [vmem:[%s11 + $0x28] sm:$0xf]
    %v2078 = vld [vmem:[%s11 + $0x2c] sm:$0xf]
    %v2083 = vunpack.c.l.b16 %v2075
    %v2084 = vunpack.c.l.b16 %v2076
    %v2085 = vunpack.c.l.b16 %v2077
    %v2086 = vunpack.c.l.b16 %v2078
    %v2087 = vpack.c.b16 %v2084, %v2083
    %v2088 = vpack.c.b16 %v2086, %v2085
    %2091 = vmatprep.subr.bf16.mxu0 0
    %2092 = vmatpush1.bf16.msra.mxu0 %v2087
    %2093 = vmatprep.subr.bf16.mxu0 0
    %2094 = vmatpush1.bf16.msra.mxu0 %v2088
    %2095 = vmatprep.subr.bf16.mxu0 0
    %2096 = vmatpush1.bf16.msra.mxu0 0
    %2097 = vmatprep.subr.bf16.mxu0 0
    %2098 = vmatpush1.bf16.msra.mxu0 0
    %2099 = vmatprep.subr.bf16.mxu0 0
    %2100 = vmatpush1.bf16.msra.mxu0 0
    %2101 = vmatprep.subr.bf16.mxu0 0
    %2102 = vmatpush1.bf16.msra.mxu0 0
    %2103 = vmatprep.subr.bf16.mxu0 0
    %2104 = vmatpush1.bf16.msra.mxu0 0
    %2105 = vmatprep.subr.bf16.mxu0 0
    %2106 = vmatpush1.bf16.msra.mxu0 0
    %2107 = vmatprep.subr.bf16.mxu0 0
    %2108 = vmatpush1.bf16.msra.mxu0 0
    %2109 = vmatprep.subr.bf16.mxu0 0
    %2110 = vmatpush1.bf16.msra.mxu0 0
    %2111 = vmatprep.subr.bf16.mxu0 0
    %2112 = vmatpush1.bf16.msra.mxu0 0
    %2113 = vmatprep.subr.bf16.mxu0 0
    %2114 = vmatpush1.bf16.msra.mxu0 0
    %2115 = vmatprep.subr.bf16.mxu0 0
    %2116 = vmatpush1.bf16.msra.mxu0 0
    %2117 = vmatprep.subr.bf16.mxu0 0
    %2118 = vmatpush1.bf16.msra.mxu0 0
    %2119 = vmatprep.subr.bf16.mxu0 0
    %2120 = vmatpush1.bf16.msra.mxu0 0
    %2121 = vmatprep.subr.bf16.mxu0 0
    %2122 = vmatpush1.bf16.msra.mxu0 0
    %2123 = vmatprep.mubr.bf16.mxu0 0
    %2124 = vmatmul.mubr.bf16.gmra.mrb[0].mxu0 %v1977
    %v2125 = vpop.f32.mrb[0].mxu0
    %v2126 = vadd.f32 0.0, %v2125
    %v2127 = vpop.f32.mrb[0].mxu0
    %v2128 = vpop.f32.mrb[0].mxu0
    %v2129 = vpop.f32.mrb[0].mxu0
    %2130 = vdwg.mxu0
    %v2132 = vrot.slane %v2014, 7
    %v2134 = vsel %vm369, 0.0, %v2132
    %v2135 = vadd.f32 %v2134, %v2070
    %v2137 = vrot.slane %v2126, 1
    %v2139 = vsel %vm897, %v2137, 0.0
    %v2140 = vadd.f32 %v2135, %v2139
    %v2141 = vld [vmem:[%s12] sm:$0x1]
    %v2143 = vlaneseq
    %v2144 = vshrl.u32 %v2143, 7
    %v2145 = vsub.s32 0, %v2144
    %v2146 = vrot.slane %v2141, %v2145
    %v2148 = vadd.f32 %v2140, %v2146
    %v2149 = vadd.f32 %v2148, %v1765
    %s2150 = scalar_lea.vmem [#allocation3], 4
    %2151 = vst.msk [vmem:[%s2150] sm:$0xf] %vm1102, %v2149
    // Predicated region
    $region54: #{tpu_custom_call.1} parent=1 // pred_check
      _
    $region55: #{tpu_custom_call.1} parent=1 // pred_check_branch
      %2153 = sbr.rel (0) target = $region57
    $region56: #{tpu_custom_call.1} parent=1 // pred_region
      %s2155 = ssub.s32 128, 128
      %2156 = vsyncadd [#allocation4], %s2155
      %s2157 = sshll.u32 [#allocation3], 4
      %s2158 = int_to_ptr.vmem [resolvable:$true] %s2157
      %2163 = dma.vmem_to_hbm [thread:$0]  %s2158, 128, %s13, [#allocation4], 64, 64, 4
    $region57: #{tpu_custom_call.1} parent=1 // pred_fallthru
      _
    // Predicated region
    $region58: #{tpu_custom_call.1} parent=1 // pred_check
      _
    $region59: #{tpu_custom_call.1} parent=1 // pred_check_branch
      %2165 = sbr.rel (0) target = $region61
    $region60: #{tpu_custom_call.1} parent=1 // pred_region
      %2166 = dma.done [#allocation4], 128
    $region61: #{tpu_custom_call.1} parent=1 // pred_fallthru
      _
    %2167 = vsyncpa [#allocation4], 1

</llo_original>
